<compile_context>
chip_gen: v5e
topology: v5e:2x2
jax: 0.10.0
libtpu: 0.0.40
codegen_flags: <defaults>
</compile_context>

<pallas_src>
import functools
import math

import jax
import jax.numpy as jnp
from jax.experimental import pallas as pl
from jax.experimental.pallas import tpu as pltpu


def _round_up(x: int, m: int) -> int:
    return ((x + m - 1) // m) * m


# ----------------------------------------------------------------------------
# Single fused Pallas kernel for the whole AE forward pass (one batch tile).
# ----------------------------------------------------------------------------
def _ae_fused_kernel(*refs, depth: int):
    """refs layout:
      refs[0]             : x tile        (TILE_B, flat)  bf16
      refs[1 : 1 + 2*L]   : (w, b) per layer, L = 2*depth + 2, in forward
                            order (enc fcs..., enc_out, dec fcs..., dec_out)
                            w: (in, out) bf16, b: (1, out) f32
      refs[1 + 2*L :]     : outputs: a_enc (depth, bf16), z (f32),
                            a_dec (depth, bf16), x_hat (f32)
    """
    n_layers = 2 * depth + 2
    n_in = 1 + 2 * n_layers
    x_ref = refs[0]
    p = refs[1:n_in]
    outs = refs[n_in:]

    def layer(h, idx, act):
        w = p[2 * idx][...]          # bf16 weights (in, out)
        b = p[2 * idx + 1][...]      # f32 bias     (1, out)
        # bf16 MXU matmul, f32 accumulation; elementwise post-ops in f32.
        y = jnp.dot(h.astype(jnp.bfloat16), w,
                    preferred_element_type=jnp.float32) + b
        if act == "relu":
            y = jnp.maximum(y, 0.0)
        elif act == "sigmoid":
            # Route the divide onto the EUP approx-reciprocal slot.
            y = pl.reciprocal(1.0 + jnp.exp(-y), approx=True)
        return y

    h = x_ref[...]                   # bf16 input tile
    li = 0
    oi = 0
    # Encoder hidden layers (ReLU)
    for _ in range(depth):
        h = layer(h, li, "relu")
        outs[oi][...] = h.astype(outs[oi].dtype)
        li += 1
        oi += 1
    # Encoder output -> latent z (no activation)
    z = layer(h, li, "none")
    outs[oi][...] = z.astype(outs[oi].dtype)
    li += 1
    oi += 1
    # Decoder hidden layers (ReLU)
    h = z
    for _ in range(depth):
        h = layer(h, li, "relu")
        outs[oi][...] = h.astype(outs[oi].dtype)
        li += 1
        oi += 1
    # Decoder output (sigmoid) -> reconstruction
    outs[oi][...] = layer(h, li, "sigmoid").astype(outs[oi].dtype)


# ----------------------------------------------------------------------------
# Parameter init (PyTorch-style uniform(-k, k), k = 1/sqrt(fan_in)) + packing
# ----------------------------------------------------------------------------
def init_linear(key, in_dim, out_dim):
    kw, kb = jax.random.split(key)
    bound = 1.0 / math.sqrt(in_dim)
    w = jax.random.uniform(kw, (in_dim, out_dim), jnp.float32, -bound, bound)
    b = jax.random.uniform(kb, (out_dim,), jnp.float32, -bound, bound)
    return w, b


def init_ae_params(key, width, depth, latent_size, img_size):
    """Returns the list of (w, b) f32 layers in forward order."""
    flat = int(img_size[0] * img_size[1] * img_size[2])
    dims = [flat] + [width] * depth + [latent_size] + [width] * depth + [flat]
    layers = []
    for i in range(len(dims) - 1):
        key, sub = jax.random.split(key)
        layers.append(init_linear(sub, dims[i], dims[i + 1]))
    return layers


def pack_linear(w, b):
    """Weights bf16 (native MXU dtype, halves HBM fetch), bias (1, out) f32."""
    return w.astype(jnp.bfloat16), b.reshape(1, -1).astype(jnp.float32)


# ----------------------------------------------------------------------------
# Forward pass (matches AE.forward semantics)
# ----------------------------------------------------------------------------
@functools.partial(jax.jit, static_argnames=("depth", "width", "latent_size", "img_size"))
def ae_forward(kernel_params, x, *, depth, width, latent_size, img_size):
    B = x.shape[0]
    flat = int(img_size[0] * img_size[1] * img_size[2])

    # Batch tile: whole batch for small B (grid of 1, no padding/slicing);
    # 512-row tiles beyond that (HBM-roofline-efficient, keeps VMEM bounded on
    # v7x; partial tail blocks are handled by Pallas).
    tile_b = B if B <= 512 else 512
    num_tiles = pl.cdiv(B, tile_b)

    # Flatten (free reshape of contiguous NCHW) and cast to bf16.
    x_flat = x.reshape(B, flat).astype(jnp.bfloat16)

    flat_inputs = [x_flat]
    for w_p, b_p in kernel_params:
        flat_inputs += [w_p, b_p]

    # Outputs at their true widths; hidden activations as bf16.
    out_shapes = (
        [jax.ShapeDtypeStruct((B, width), jnp.bfloat16)] * depth
        + [jax.ShapeDtypeStruct((B, latent_size), jnp.float32)]
        + [jax.ShapeDtypeStruct((B, width), jnp.bfloat16)] * depth
        + [jax.ShapeDtypeStruct((B, flat), jnp.float32)]
    )

    # x / activations blocked over batch; weights & biases constant-indexed
    # (fetched once, VMEM-resident across the whole grid).
    x_spec = pl.BlockSpec((tile_b, flat), lambda i: (i, 0))
    param_specs = []
    for w_p, b_p in kernel_params:
        param_specs.append(pl.BlockSpec(w_p.shape, lambda i: (0, 0)))
        param_specs.append(pl.BlockSpec(b_p.shape, lambda i: (0, 0)))

    out_specs = (
        [pl.BlockSpec((tile_b, width), lambda i: (i, 0))] * depth
        + [pl.BlockSpec((tile_b, latent_size), lambda i: (i, 0))]
        + [pl.BlockSpec((tile_b, width), lambda i: (i, 0))] * depth
        + [pl.BlockSpec((tile_b, flat), lambda i: (i, 0))]
    )

    # VMEM budget from actual buffer arithmetic (2x for double-buffering of
    # pipelined operands) + headroom for in-kernel f32 temporaries.
    lane = lambda d: _round_up(d, 128)
    sub = lambda d: _round_up(d, 8)
    dims = [flat] + [width] * depth + [latent_size] + [width] * depth + [flat]
    w_bytes = sum(sub(dims[i]) * lane(dims[i + 1]) * 2 + lane(dims[i + 1]) * 4
                  for i in range(len(dims) - 1))
    tb = sub(tile_b)
    act_bytes = (tb * lane(flat) * 2                       # x in (bf16)
                 + 2 * depth * tb * lane(width) * 2        # hidden acts (bf16)
                 + tb * lane(latent_size) * 4              # z (f32)
                 + tb * lane(flat) * 4)                    # x_hat (f32)
    vmem_limit = int(min(96 << 20, 2 * (w_bytes + act_bytes) + (8 << 20)))

    outs = pl.pallas_call(
        functools.partial(_ae_fused_kernel, depth=depth),
        grid=(num_tiles,),
        out_shape=tuple(out_shapes),
        in_specs=[x_spec] + param_specs,
        out_specs=tuple(out_specs),
        compiler_params=pltpu.CompilerParams(
            dimension_semantics=("parallel",),
            vmem_limit_bytes=vmem_limit),
    )(*flat_inputs)

    a_enc = list(outs[:depth])
    z = outs[depth]
    a_dec = list(outs[depth + 1: 2 * depth + 1])
    x_hat = outs[2 * depth + 1].reshape((B,) + tuple(img_size))

    A = a_enc + [z] + a_dec
    return dict(x_hat=x_hat, A=A, z=z)


# ----------------------------------------------------------------------------
# Main
# ----------------------------------------------------------------------------
if __name__ == "__main__":
    width = 256
    depth = 1
    latent_size = 10
    img_size = (1, 28, 28)
    B = 2

    key = jax.random.PRNGKey(0)
    key, pkey, xkey = jax.random.split(key, 3)
    layers = init_ae_params(pkey, width, depth, latent_size, img_size)
    kernel_params = [pack_linear(w, b) for (w, b) in layers]
    x = jax.random.uniform(xkey, (B,) + img_size, jnp.float32)  # NCHW input

    out = ae_forward(kernel_params, x, depth=depth, width=width,
                     latent_size=latent_size, img_size=img_size)
    jax.block_until_ready(out)

    # --- plain-JAX reference reproducing the kernel's math (bf16 matmul
    #     operands, f32 accumulation / elementwise) on the same params ---
    flat = int(img_size[0] * img_size[1] * img_size[2])
    acts = ["relu"] * depth + ["none"] + ["relu"] * depth + ["sigmoid"]
    h_ref = x.reshape(B, flat).astype(jnp.bfloat16)
    A_ref = []
    z_ref = None
    for i, (w_p, b_p) in enumerate(kernel_params):
        y = jnp.dot(h_ref.astype(jnp.bfloat16), w_p,
                    preferred_element_type=jnp.float32) + b_p[0]
        if acts[i] == "relu":
            y = jnp.maximum(y, 0.0)
        elif acts[i] == "sigmoid":
            y = jax.nn.sigmoid(y)
        if i < len(kernel_params) - 1:
            A_ref.append(y)
        if i == depth:
            z_ref = y
        h_ref = y
    x_hat_ref = h_ref.reshape((B,) + img_size)

    assert out["x_hat"].shape == (B,) + img_size
    assert out["z"].shape == (B, latent_size)
    assert len(out["A"]) == 2 * depth + 1
    assert jnp.allclose(out["z"], z_ref, atol=2e-3, rtol=1e-3)
    # sigmoid uses EUP approx reciprocal -> slightly relaxed tolerance
    assert jnp.allclose(out["x_hat"], x_hat_ref, atol=1e-2)
    for a_out, a_r in zip(out["A"], A_ref):
        # hidden activations are stored as bf16 by the kernel
        assert jnp.allclose(a_out.astype(jnp.float32), a_r, atol=3e-2, rtol=2e-2)

    print("KERNEL_OK")
</pallas_src>

<mosaic_0001>
module attributes {stable_mosaic.version = 11 : i64} {
  func.func @_ae_fused_kernel(%arg0: i32, %arg1: memref<2x784xbf16, #tpu.memory_space<vmem>>, %arg2: memref<784x256xbf16, #tpu.memory_space<vmem>>, %arg3: memref<1x256xf32, #tpu.memory_space<vmem>>, %arg4: memref<256x10xbf16, #tpu.memory_space<vmem>>, %arg5: memref<1x10xf32, #tpu.memory_space<vmem>>, %arg6: memref<10x256xbf16, #tpu.memory_space<vmem>>, %arg7: memref<1x256xf32, #tpu.memory_space<vmem>>, %arg8: memref<256x784xbf16, #tpu.memory_space<vmem>>, %arg9: memref<1x784xf32, #tpu.memory_space<vmem>>, %arg10: memref<2x256xbf16, #tpu.memory_space<vmem>>, %arg11: memref<2x10xf32, #tpu.memory_space<vmem>>, %arg12: memref<2x256xbf16, #tpu.memory_space<vmem>>, %arg13: memref<2x784xf32, #tpu.memory_space<vmem>>) attributes {dimension_semantics = [#tpu.dimension_semantics<parallel>], iteration_bounds = array<i64: 1>, scalar_prefetch = 0 : i64, scratch_operands = 0 : i64, tpu.core_type = #tpu.core_type<tc>, window_params = [{transform_indices = @transform_0, window_bounds = array<i64: 2, 784>}, {pipeline_mode = #tpu.pipeline_mode<synchronous>, transform_indices = @transform_1, window_bounds = array<i64: 784, 256>}, {pipeline_mode = #tpu.pipeline_mode<synchronous>, transform_indices = @transform_2, window_bounds = array<i64: 1, 256>}, {pipeline_mode = #tpu.pipeline_mode<synchronous>, transform_indices = @transform_3, window_bounds = array<i64: 256, 10>}, {pipeline_mode = #tpu.pipeline_mode<synchronous>, transform_indices = @transform_4, window_bounds = array<i64: 1, 10>}, {pipeline_mode = #tpu.pipeline_mode<synchronous>, transform_indices = @transform_5, window_bounds = array<i64: 10, 256>}, {pipeline_mode = #tpu.pipeline_mode<synchronous>, transform_indices = @transform_6, window_bounds = array<i64: 1, 256>}, {pipeline_mode = #tpu.pipeline_mode<synchronous>, transform_indices = @transform_7, window_bounds = array<i64: 256, 784>}, {pipeline_mode = #tpu.pipeline_mode<synchronous>, transform_indices = @transform_8, window_bounds = array<i64: 1, 784>}, {transform_indices = @transform_9, window_bounds = array<i64: 2, 256>}, {transform_indices = @transform_10, window_bounds = array<i64: 2, 10>}, {transform_indices = @transform_11, window_bounds = array<i64: 2, 256>}, {transform_indices = @transform_12, window_bounds = array<i64: 2, 784>}]} {
    %c0 = arith.constant 0 : index
    %c0_0 = arith.constant 0 : index
    %0 = vector.load %arg1[%c0, %c0_0] : memref<2x784xbf16, #tpu.memory_space<vmem>>, vector<2x784xbf16>
    %c0_1 = arith.constant 0 : index
    %c0_2 = arith.constant 0 : index
    %1 = vector.load %arg2[%c0_1, %c0_2] : memref<784x256xbf16, #tpu.memory_space<vmem>>, vector<784x256xbf16>
    %c0_3 = arith.constant 0 : index
    %c0_4 = arith.constant 0 : index
    %2 = vector.load %arg3[%c0_3, %c0_4] : memref<1x256xf32, #tpu.memory_space<vmem>>, vector<1x256xf32>
    %cst = arith.constant dense<0.000000e+00> : vector<2x256xf32>
    %3 = tpu.matmul %0, %1, %cst {dimension_numbers = #tpu.dot_dimension_numbers<[1], [0], [0], [1], [0, 0, 1, 1], [], []>} : vector<2x784xbf16>, vector<784x256xbf16>, vector<2x256xf32> -> vector<2x256xf32>
    %4 = vector.broadcast %2 : vector<1x256xf32> to vector<2x256xf32>
    %5 = arith.addf %3, %4 : vector<2x256xf32>
    %cst_5 = arith.constant 0.000000e+00 : f32
    %6 = vector.broadcast %cst_5 : f32 to vector<2x256xf32>
    %7 = arith.maximumf %5, %6 : vector<2x256xf32>
    %8 = arith.truncf %7 : vector<2x256xf32> to vector<2x256xbf16>
    %c0_6 = arith.constant 0 : index
    %c0_7 = arith.constant 0 : index
    %9 = vector.load %arg10[%c0_6, %c0_7] : memref<2x256xbf16, #tpu.memory_space<vmem>>, vector<2x256xbf16>
    tpu.vector_store %arg10[%c0_6, %c0_7], %8 {strides = array<i32>} : memref<2x256xbf16, #tpu.memory_space<vmem>>, vector<2x256xbf16>,
    %c0_8 = arith.constant 0 : index
    %c0_9 = arith.constant 0 : index
    %10 = vector.load %arg4[%c0_8, %c0_9] : memref<256x10xbf16, #tpu.memory_space<vmem>>, vector<256x10xbf16>
    %c0_10 = arith.constant 0 : index
    %c0_11 = arith.constant 0 : index
    %11 = vector.load %arg5[%c0_10, %c0_11] : memref<1x10xf32, #tpu.memory_space<vmem>>, vector<1x10xf32>
    %12 = arith.truncf %7 : vector<2x256xf32> to vector<2x256xbf16>
    %cst_12 = arith.constant dense<0.000000e+00> : vector<2x10xf32>
    %13 = tpu.matmul %12, %10, %cst_12 {dimension_numbers = #tpu.dot_dimension_numbers<[1], [0], [0], [1], [0, 0, 1, 1], [], []>} : vector<2x256xbf16>, vector<256x10xbf16>, vector<2x10xf32> -> vector<2x10xf32>
    %14 = vector.broadcast %11 : vector<1x10xf32> to vector<2x10xf32>
    %15 = arith.addf %13, %14 : vector<2x10xf32>
    %c0_13 = arith.constant 0 : index
    %c0_14 = arith.constant 0 : index
    %16 = vector.load %arg11[%c0_13, %c0_14] : memref<2x10xf32, #tpu.memory_space<vmem>>, vector<2x10xf32>
    tpu.vector_store %arg11[%c0_13, %c0_14], %15 {strides = array<i32>} : memref<2x10xf32, #tpu.memory_space<vmem>>, vector<2x10xf32>,
    %c0_15 = arith.constant 0 : index
    %c0_16 = arith.constant 0 : index
    %17 = vector.load %arg6[%c0_15, %c0_16] : memref<10x256xbf16, #tpu.memory_space<vmem>>, vector<10x256xbf16>
    %c0_17 = arith.constant 0 : index
    %c0_18 = arith.constant 0 : index
    %18 = vector.load %arg7[%c0_17, %c0_18] : memref<1x256xf32, #tpu.memory_space<vmem>>, vector<1x256xf32>
    %19 = arith.truncf %15 : vector<2x10xf32> to vector<2x10xbf16>
    %cst_19 = arith.constant dense<0.000000e+00> : vector<2x256xf32>
    %20 = tpu.matmul %19, %17, %cst_19 {dimension_numbers = #tpu.dot_dimension_numbers<[1], [0], [0], [1], [0, 0, 1, 1], [], []>} : vector<2x10xbf16>, vector<10x256xbf16>, vector<2x256xf32> -> vector<2x256xf32>
    %21 = vector.broadcast %18 : vector<1x256xf32> to vector<2x256xf32>
    %22 = arith.addf %20, %21 : vector<2x256xf32>
    %cst_20 = arith.constant 0.000000e+00 : f32
    %23 = vector.broadcast %cst_20 : f32 to vector<2x256xf32>
    %24 = arith.maximumf %22, %23 : vector<2x256xf32>
    %25 = arith.truncf %24 : vector<2x256xf32> to vector<2x256xbf16>
    %c0_21 = arith.constant 0 : index
    %c0_22 = arith.constant 0 : index
    %26 = vector.load %arg12[%c0_21, %c0_22] : memref<2x256xbf16, #tpu.memory_space<vmem>>, vector<2x256xbf16>
    tpu.vector_store %arg12[%c0_21, %c0_22], %25 {strides = array<i32>} : memref<2x256xbf16, #tpu.memory_space<vmem>>, vector<2x256xbf16>,
    %c0_23 = arith.constant 0 : index
    %c0_24 = arith.constant 0 : index
    %27 = vector.load %arg8[%c0_23, %c0_24] : memref<256x784xbf16, #tpu.memory_space<vmem>>, vector<256x784xbf16>
    %c0_25 = arith.constant 0 : index
    %c0_26 = arith.constant 0 : index
    %28 = vector.load %arg9[%c0_25, %c0_26] : memref<1x784xf32, #tpu.memory_space<vmem>>, vector<1x784xf32>
    %29 = arith.truncf %24 : vector<2x256xf32> to vector<2x256xbf16>
    %cst_27 = arith.constant dense<0.000000e+00> : vector<2x784xf32>
    %30 = tpu.matmul %29, %27, %cst_27 {dimension_numbers = #tpu.dot_dimension_numbers<[1], [0], [0], [1], [0, 0, 1, 1], [], []>} : vector<2x256xbf16>, vector<256x784xbf16>, vector<2x784xf32> -> vector<2x784xf32>
    %31 = vector.broadcast %28 : vector<1x784xf32> to vector<2x784xf32>
    %32 = arith.addf %30, %31 : vector<2x784xf32>
    %cst_28 = arith.constant 0.000000e+00 : f32
    %33 = vector.broadcast %cst_28 : f32 to vector<2x784xf32>
    %34 = arith.subf %33, %32 : vector<2x784xf32>
    %35 = math.exp %34 : vector<2x784xf32>
    %cst_29 = arith.constant 1.000000e+00 : f32
    %36 = vector.broadcast %cst_29 : f32 to vector<2x784xf32>
    %37 = arith.addf %36, %35 : vector<2x784xf32>
    %38 = tpu.reciprocal %37 {approx = true} : vector<2x784xf32> -> vector<2x784xf32>
    %c0_30 = arith.constant 0 : index
    %c0_31 = arith.constant 0 : index
    %39 = vector.load %arg13[%c0_30, %c0_31] : memref<2x784xf32, #tpu.memory_space<vmem>>, vector<2x784xf32>
    tpu.vector_store %arg13[%c0_30, %c0_31], %38 {strides = array<i32>} : memref<2x784xf32, #tpu.memory_space<vmem>>, vector<2x784xf32>,
    return
  }
  func.func @transform_0(%arg0: i32) -> (i32, i32) {
    %c0_i32 = arith.constant 0 : i32
    %c0_i32_0 = arith.constant 0 : i32
    return %arg0, %c0_i32 : i32, i32
  }
  func.func @transform_1(%arg0: i32) -> (i32, i32) {
    %c0_i32 = arith.constant 0 : i32
    %c0_i32_0 = arith.constant 0 : i32
    %c0_i32_1 = arith.constant 0 : i32
    return %c0_i32, %c0_i32_0 : i32, i32
  }
  func.func @transform_2(%arg0: i32) -> (i32, i32) {
    %c0_i32 = arith.constant 0 : i32
    %c0_i32_0 = arith.constant 0 : i32
    %c0_i32_1 = arith.constant 0 : i32
    return %c0_i32, %c0_i32_0 : i32, i32
  }
  func.func @transform_3(%arg0: i32) -> (i32, i32) {
    %c0_i32 = arith.constant 0 : i32
    %c0_i32_0 = arith.constant 0 : i32
    %c0_i32_1 = arith.constant 0 : i32
    return %c0_i32, %c0_i32_0 : i32, i32
  }
  func.func @transform_4(%arg0: i32) -> (i32, i32) {
    %c0_i32 = arith.constant 0 : i32
    %c0_i32_0 = arith.constant 0 : i32
    %c0_i32_1 = arith.constant 0 : i32
    return %c0_i32, %c0_i32_0 : i32, i32
  }
  func.func @transform_5(%arg0: i32) -> (i32, i32) {
    %c0_i32 = arith.constant 0 : i32
    %c0_i32_0 = arith.constant 0 : i32
    %c0_i32_1 = arith.constant 0 : i32
    return %c0_i32, %c0_i32_0 : i32, i32
  }
  func.func @transform_6(%arg0: i32) -> (i32, i32) {
    %c0_i32 = arith.constant 0 : i32
    %c0_i32_0 = arith.constant 0 : i32
    %c0_i32_1 = arith.constant 0 : i32
    return %c0_i32, %c0_i32_0 : i32, i32
  }
  func.func @transform_7(%arg0: i32) -> (i32, i32) {
    %c0_i32 = arith.constant 0 : i32
    %c0_i32_0 = arith.constant 0 : i32
    %c0_i32_1 = arith.constant 0 : i32
    return %c0_i32, %c0_i32_0 : i32, i32
  }
  func.func @transform_8(%arg0: i32) -> (i32, i32) {
    %c0_i32 = arith.constant 0 : i32
    %c0_i32_0 = arith.constant 0 : i32
    %c0_i32_1 = arith.constant 0 : i32
    return %c0_i32, %c0_i32_0 : i32, i32
  }
  func.func @transform_9(%arg0: i32) -> (i32, i32) {
    %c0_i32 = arith.constant 0 : i32
    %c0_i32_0 = arith.constant 0 : i32
    return %arg0, %c0_i32 : i32, i32
  }
  func.func @transform_10(%arg0: i32) -> (i32, i32) {
    %c0_i32 = arith.constant 0 : i32
    %c0_i32_0 = arith.constant 0 : i32
    return %arg0, %c0_i32 : i32, i32
  }
  func.func @transform_11(%arg0: i32) -> (i32, i32) {
    %c0_i32 = arith.constant 0 : i32
    %c0_i32_0 = arith.constant 0 : i32
    return %arg0, %c0_i32 : i32, i32
  }
  func.func @transform_12(%arg0: i32) -> (i32, i32) {
    %c0_i32 = arith.constant 0 : i32
    %c0_i32_0 = arith.constant 0 : i32
    return %arg0, %c0_i32 : i32, i32
  }
}

</mosaic_0001>

<llo_original>
// kernel: ae_forward.1
$region0: #{ae_forward.1}
  #allocation0 [shape = 'u32[]', space=smem, size = 0x4, offset = 0x4, fixed_abs, tag = 'smem constant byte address 0x4 - core index']
  #allocation1 [shape = 'u32[72,128]{1,0:T(1,128)}', space=vmem, size = 0x9000, scoped, tag = 'internal scratch']
  %s0 = inlined_call_operand.vmem [shape: bf16[2,784], index: 0, kind: input, shape index: {}]
  %s1 = inlined_call_operand.vmem [shape: bf16[784,256], index: 1, kind: input, shape index: {}]
  %s2 = inlined_call_operand.vmem [shape: f32[1,256], index: 2, kind: input, shape index: {}]
  %s3 = inlined_call_operand.vmem [shape: bf16[256,10], index: 3, kind: input, shape index: {}]
  %s4 = inlined_call_operand.vmem [shape: f32[1,10], index: 4, kind: input, shape index: {}]
  %s5 = inlined_call_operand.vmem [shape: bf16[10,256], index: 5, kind: input, shape index: {}]
  %s6 = inlined_call_operand.vmem [shape: f32[1,256], index: 6, kind: input, shape index: {}]
  %s7 = inlined_call_operand.vmem [shape: bf16[256,784], index: 7, kind: input, shape index: {}]
  %s8 = inlined_call_operand.vmem [shape: f32[1,784], index: 8, kind: input, shape index: {}]
  %s9 = inlined_call_operand.hbm [shape: bf16[2,256], index: 9, kind: output, shape index: {0}]
  %s10 = inlined_call_operand.vmem [shape: f32[2,10], index: 10, kind: output, shape index: {1}]
  %s11 = inlined_call_operand.hbm [shape: bf16[2,256], index: 11, kind: output, shape index: {2}]
  %s12 = inlined_call_operand.vmem [shape: f32[2,784], index: 12, kind: output, shape index: {3}]
  %13 = xla_tuple %s9, %s10, %s11, %s12
  %s14 = sld [smem:[#allocation0]]
  $region70: #{ae_forward.1} parent=0
    _
  %s16 = ssub.s32 1, %s14
  %s17 = scalar_select 0, %s16, %s14
  $region1: #{ae_forward.1} parent=0
    #allocation2 [shape = 'u8[1024]{0}', space=vmem, size = 0x400, scoped, tag = 'output window, operand 0, single buffered']
    #allocation3 [shape = 's32[1]{0}', space=sflag, size = 0x4, scoped, tag = 'scoped memory for ae_forward.1']
    #allocation4 [shape = 'u8[1024]{0}', space=vmem, size = 0x400, scoped, tag = 'output window, operand 2, single buffered']
    #allocation5 [shape = 's32[1]{0}', space=sflag, size = 0x4, scoped, tag = 'scoped memory for ae_forward.1']
    %18 = vsyncpa [#allocation3], 0
    %19 = vsyncpa [#allocation5], 0
    // Predicated region
    $region2: #{ae_forward.1} parent=1 // pred_check
      _
    $region3: #{ae_forward.1} parent=1 // pred_check_branch
      %21 = sbr.rel (0) target = $region5
    $region4: #{ae_forward.1} parent=1 // pred_region
      _
    $region5: #{ae_forward.1} parent=1 // pred_fallthru
      _
    // Predicated region
    $region6: #{ae_forward.1} parent=1 // pred_check
      _
    $region7: #{ae_forward.1} parent=1 // pred_check_branch
      %23 = sbr.rel (0) target = $region9
    $region8: #{ae_forward.1} parent=1 // pred_region
      _
    $region9: #{ae_forward.1} parent=1 // pred_fallthru
      _
    // Predicated region
    $region10: #{ae_forward.1} parent=1 // pred_check
      _
    $region11: #{ae_forward.1} parent=1 // pred_check_branch
      %25 = sbr.rel (0) target = $region13
    $region12: #{ae_forward.1} parent=1 // pred_region
      _
    $region13: #{ae_forward.1} parent=1 // pred_fallthru
      _
    // Predicated region
    $region14: #{ae_forward.1} parent=1 // pred_check
      _
    $region15: #{ae_forward.1} parent=1 // pred_check_branch
      %27 = sbr.rel (0) target = $region17
    $region16: #{ae_forward.1} parent=1 // pred_region
      _
    $region17: #{ae_forward.1} parent=1 // pred_fallthru
      _
    // Predicated region
    $region18: #{ae_forward.1} parent=1 // pred_check
      _
    $region19: #{ae_forward.1} parent=1 // pred_check_branch
      %29 = sbr.rel (0) target = $region21
    $region20: #{ae_forward.1} parent=1 // pred_region
      _
    $region21: #{ae_forward.1} parent=1 // pred_fallthru
      _
    // Predicated region
    $region22: #{ae_forward.1} parent=1 // pred_check
      _
    $region23: #{ae_forward.1} parent=1 // pred_check_branch
      %31 = sbr.rel (0) target = $region25
    $region24: #{ae_forward.1} parent=1 // pred_region
      _
    $region25: #{ae_forward.1} parent=1 // pred_fallthru
      _
    // Predicated region
    $region26: #{ae_forward.1} parent=1 // pred_check
      _
    $region27: #{ae_forward.1} parent=1 // pred_check_branch
      %33 = sbr.rel (0) target = $region29
    $region28: #{ae_forward.1} parent=1 // pred_region
      _
    $region29: #{ae_forward.1} parent=1 // pred_fallthru
      _
    // Predicated region
    $region30: #{ae_forward.1} parent=1 // pred_check
      _
    $region31: #{ae_forward.1} parent=1 // pred_check_branch
      %35 = sbr.rel (0) target = $region33
    $region32: #{ae_forward.1} parent=1 // pred_region
      _
    $region33: #{ae_forward.1} parent=1 // pred_fallthru
      _
    // Predicated region
    $region34: #{ae_forward.1} parent=1 // pred_check
      _
    $region35: #{ae_forward.1} parent=1 // pred_check_branch
      %37 = sbr.rel (0) target = $region37
    $region36: #{ae_forward.1} parent=1 // pred_region
      _
    $region37: #{ae_forward.1} parent=1 // pred_fallthru
      _
    %v39 = vld [vmem:[%s0] sm:$0x7f]
    %v40 = vld [vmem:[%s1] sm:$0xff]
    %v41 = vld [vmem:[%s1 + $0x8] sm:$0xff]
    %v42 = vld [vmem:[%s1 + $0x10] sm:$0xff]
    %v43 = vld [vmem:[%s1 + $0x18] sm:$0xff]
    %v44 = vld [vmem:[%s1 + $0x20] sm:$0xff]
    %v45 = vld [vmem:[%s1 + $0x28] sm:$0xff]
    %v46 = vld [vmem:[%s1 + $0x30] sm:$0xff]
    %v47 = vld [vmem:[%s1 + $0x38] sm:$0xff]
    %v48 = vld [vmem:[%s1 + $0x40] sm:$0xff]
    %v49 = vld [vmem:[%s1 + $0x48] sm:$0xff]
    %v50 = vld [vmem:[%s1 + $0x50] sm:$0xff]
    %v51 = vld [vmem:[%s1 + $0x58] sm:$0xff]
    %v52 = vld [vmem:[%s1 + $0x60] sm:$0xff]
    %v53 = vld [vmem:[%s1 + $0x68] sm:$0xff]
    %v54 = vld [vmem:[%s1 + $0x70] sm:$0xff]
    %v55 = vld [vmem:[%s1 + $0x78] sm:$0xff]
    %v56 = vld [vmem:[%s1 + $0x80] sm:$0xff]
    %v57 = vld [vmem:[%s1 + $0x88] sm:$0xff]
    %v58 = vld [vmem:[%s1 + $0x90] sm:$0xff]
    %v59 = vld [vmem:[%s1 + $0x98] sm:$0xff]
    %v60 = vld [vmem:[%s1 + $0xa0] sm:$0xff]
    %v61 = vld [vmem:[%s1 + $0xa8] sm:$0xff]
    %v62 = vld [vmem:[%s1 + $0xb0] sm:$0xff]
    %v63 = vld [vmem:[%s1 + $0xb8] sm:$0xff]
    %v64 = vld [vmem:[%s1 + $0xc0] sm:$0xff]
    %v65 = vld [vmem:[%s1 + $0xc8] sm:$0xff]
    %v66 = vld [vmem:[%s1 + $0xd0] sm:$0xff]
    %v67 = vld [vmem:[%s1 + $0xd8] sm:$0xff]
    %v68 = vld [vmem:[%s1 + $0xe0] sm:$0xff]
    %v69 = vld [vmem:[%s1 + $0xe8] sm:$0xff]
    %v70 = vld [vmem:[%s1 + $0xf0] sm:$0xff]
    %v71 = vld [vmem:[%s1 + $0xf8] sm:$0xff]
    %v72 = vld [vmem:[%s1 + $0x100] sm:$0xff]
    %v73 = vld [vmem:[%s1 + $0x108] sm:$0xff]
    %v74 = vld [vmem:[%s1 + $0x110] sm:$0xff]
    %v75 = vld [vmem:[%s1 + $0x118] sm:$0xff]
    %v76 = vld [vmem:[%s1 + $0x120] sm:$0xff]
    %v77 = vld [vmem:[%s1 + $0x128] sm:$0xff]
    %v78 = vld [vmem:[%s1 + $0x130] sm:$0xff]
    %v79 = vld [vmem:[%s1 + $0x138] sm:$0xff]
    %v80 = vld [vmem:[%s1 + $0x140] sm:$0xff]
    %v81 = vld [vmem:[%s1 + $0x148] sm:$0xff]
    %v82 = vld [vmem:[%s1 + $0x150] sm:$0xff]
    %v83 = vld [vmem:[%s1 + $0x158] sm:$0xff]
    %v84 = vld [vmem:[%s1 + $0x160] sm:$0xff]
    %v85 = vld [vmem:[%s1 + $0x168] sm:$0xff]
    %v86 = vld [vmem:[%s1 + $0x170] sm:$0xff]
    %v87 = vld [vmem:[%s1 + $0x178] sm:$0xff]
    %v88 = vld [vmem:[%s1 + $0x180] sm:$0xff]
    %v89 = vld [vmem:[%s1 + $0x188] sm:$0xff]
    %v90 = vld [vmem:[%s1 + $0x190] sm:$0xff]
    %v91 = vld [vmem:[%s1 + $0x198] sm:$0xff]
    %v92 = vld [vmem:[%s1 + $0x1a0] sm:$0xff]
    %v93 = vld [vmem:[%s1 + $0x1a8] sm:$0xff]
    %v94 = vld [vmem:[%s1 + $0x1b0] sm:$0xff]
    %v95 = vld [vmem:[%s1 + $0x1b8] sm:$0xff]
    %v96 = vld [vmem:[%s1 + $0x1c0] sm:$0xff]
    %v97 = vld [vmem:[%s1 + $0x1c8] sm:$0xff]
    %v98 = vld [vmem:[%s1 + $0x1d0] sm:$0xff]
    %v99 = vld [vmem:[%s1 + $0x1d8] sm:$0xff]
    %v100 = vld [vmem:[%s1 + $0x1e0] sm:$0xff]
    %v101 = vld [vmem:[%s1 + $0x1e8] sm:$0xff]
    %v102 = vld [vmem:[%s1 + $0x1f0] sm:$0xff]
    %v103 = vld [vmem:[%s1 + $0x1f8] sm:$0xff]
    %v104 = vld [vmem:[%s1 + $0x200] sm:$0xff]
    %v105 = vld [vmem:[%s1 + $0x208] sm:$0xff]
    %v106 = vld [vmem:[%s1 + $0x210] sm:$0xff]
    %v107 = vld [vmem:[%s1 + $0x218] sm:$0xff]
    %v108 = vld [vmem:[%s1 + $0x220] sm:$0xff]
    %v109 = vld [vmem:[%s1 + $0x228] sm:$0xff]
    %v110 = vld [vmem:[%s1 + $0x230] sm:$0xff]
    %v111 = vld [vmem:[%s1 + $0x238] sm:$0xff]
    %v112 = vld [vmem:[%s1 + $0x240] sm:$0xff]
    %v113 = vld [vmem:[%s1 + $0x248] sm:$0xff]
    %v114 = vld [vmem:[%s1 + $0x250] sm:$0xff]
    %v115 = vld [vmem:[%s1 + $0x258] sm:$0xff]
    %v116 = vld [vmem:[%s1 + $0x260] sm:$0xff]
    %v117 = vld [vmem:[%s1 + $0x268] sm:$0xff]
    %v118 = vld [vmem:[%s1 + $0x270] sm:$0xff]
    %v119 = vld [vmem:[%s1 + $0x278] sm:$0xff]
    %v120 = vld [vmem:[%s1 + $0x280] sm:$0xff]
    %v121 = vld [vmem:[%s1 + $0x288] sm:$0xff]
    %v122 = vld [vmem:[%s1 + $0x290] sm:$0xff]
    %v123 = vld [vmem:[%s1 + $0x298] sm:$0xff]
    %v124 = vld [vmem:[%s1 + $0x2a0] sm:$0xff]
    %v125 = vld [vmem:[%s1 + $0x2a8] sm:$0xff]
    %v126 = vld [vmem:[%s1 + $0x2b0] sm:$0xff]
    %v127 = vld [vmem:[%s1 + $0x2b8] sm:$0xff]
    %v128 = vld [vmem:[%s1 + $0x2c0] sm:$0xff]
    %v129 = vld [vmem:[%s1 + $0x2c8] sm:$0xff]
    %v130 = vld [vmem:[%s1 + $0x2d0] sm:$0xff]
    %v131 = vld [vmem:[%s1 + $0x2d8] sm:$0xff]
    %v132 = vld [vmem:[%s1 + $0x2e0] sm:$0xff]
    %v133 = vld [vmem:[%s1 + $0x2e8] sm:$0xff]
    %v134 = vld [vmem:[%s1 + $0x2f0] sm:$0xff]
    %v135 = vld [vmem:[%s1 + $0x2f8] sm:$0xff]
    %v136 = vld [vmem:[%s1 + $0x300] sm:$0xff]
    %v137 = vld [vmem:[%s1 + $0x308] sm:$0xff]
    %v138 = vld [vmem:[%s2] sm:$0x3]
    %v140 = vperm.slane %v138, 0
    %v141 = vperm.slane %v138, 1
    %145 = vst [vmem:[#allocation1] ss:$9 sm:$0xff] %v39
    %v146 = vld [vmem:[#allocation1] sm:$0xff]
    %v147 = vld [vmem:[#allocation1 + $0x9] sm:$0xff]
    %v148 = vld [vmem:[#allocation1 + $0x12] sm:$0xff]
    %v149 = vld [vmem:[#allocation1 + $0x1b] sm:$0xff]
    %v150 = vld [vmem:[#allocation1 + $0x24] sm:$0xff]
    %v151 = vld [vmem:[#allocation1 + $0x2d] sm:$0xff]
    %v152 = vld [vmem:[#allocation1 + $0x36] sm:$0xff]
    %v257 = vunpack.c.l.b16 %v40
    %v258 = vunpack.c.h.b16 %v40
    %v259 = vunpack.c.l.b16 %v41
    %v260 = vunpack.c.h.b16 %v41
    %v261 = vunpack.c.l.b16 %v42
    %v262 = vunpack.c.h.b16 %v42
    %v263 = vunpack.c.l.b16 %v43
    %v264 = vunpack.c.h.b16 %v43
    %v265 = vunpack.c.l.b16 %v44
    %v266 = vunpack.c.h.b16 %v44
    %v267 = vunpack.c.l.b16 %v45
    %v268 = vunpack.c.h.b16 %v45
    %v269 = vunpack.c.l.b16 %v46
    %v270 = vunpack.c.h.b16 %v46
    %v271 = vunpack.c.l.b16 %v47
    %v272 = vunpack.c.h.b16 %v47
    %v273 = vunpack.c.l.b16 %v48
    %v274 = vunpack.c.h.b16 %v48
    %v275 = vunpack.c.l.b16 %v49
    %v276 = vunpack.c.h.b16 %v49
    %v277 = vunpack.c.l.b16 %v50
    %v278 = vunpack.c.h.b16 %v50
    %v279 = vunpack.c.l.b16 %v51
    %v280 = vunpack.c.h.b16 %v51
    %v281 = vunpack.c.l.b16 %v52
    %v282 = vunpack.c.h.b16 %v52
    %v283 = vunpack.c.l.b16 %v53
    %v284 = vunpack.c.h.b16 %v53
    %v285 = vunpack.c.l.b16 %v54
    %v286 = vunpack.c.h.b16 %v54
    %v287 = vunpack.c.l.b16 %v55
    %v288 = vunpack.c.h.b16 %v55
    %v289 = vunpack.c.l.b16 %v56
    %v290 = vunpack.c.h.b16 %v56
    %v291 = vunpack.c.l.b16 %v57
    %v292 = vunpack.c.h.b16 %v57
    %v293 = vunpack.c.l.b16 %v58
    %v294 = vunpack.c.h.b16 %v58
    %v295 = vunpack.c.l.b16 %v59
    %v296 = vunpack.c.h.b16 %v59
    %v297 = vunpack.c.l.b16 %v60
    %v298 = vunpack.c.h.b16 %v60
    %v299 = vunpack.c.l.b16 %v61
    %v300 = vunpack.c.h.b16 %v61
    %v301 = vunpack.c.l.b16 %v62
    %v302 = vunpack.c.h.b16 %v62
    %v303 = vunpack.c.l.b16 %v63
    %v304 = vunpack.c.h.b16 %v63
    %v305 = vunpack.c.l.b16 %v64
    %v306 = vunpack.c.h.b16 %v64
    %v307 = vunpack.c.l.b16 %v65
    %v308 = vunpack.c.h.b16 %v65
    %v309 = vunpack.c.l.b16 %v66
    %v310 = vunpack.c.h.b16 %v66
    %v311 = vunpack.c.l.b16 %v67
    %v312 = vunpack.c.h.b16 %v67
    %v313 = vunpack.c.l.b16 %v68
    %v314 = vunpack.c.h.b16 %v68
    %v315 = vunpack.c.l.b16 %v69
    %v316 = vunpack.c.h.b16 %v69
    %v317 = vunpack.c.l.b16 %v70
    %v318 = vunpack.c.h.b16 %v70
    %v319 = vunpack.c.l.b16 %v71
    %v320 = vunpack.c.h.b16 %v71
    %v321 = vunpack.c.l.b16 %v72
    %v322 = vunpack.c.h.b16 %v72
    %v323 = vunpack.c.l.b16 %v73
    %v324 = vunpack.c.h.b16 %v73
    %v325 = vunpack.c.l.b16 %v74
    %v326 = vunpack.c.h.b16 %v74
    %v327 = vunpack.c.l.b16 %v75
    %v328 = vunpack.c.h.b16 %v75
    %v329 = vunpack.c.l.b16 %v76
    %v330 = vunpack.c.h.b16 %v76
    %v331 = vunpack.c.l.b16 %v77
    %v332 = vunpack.c.h.b16 %v77
    %v333 = vunpack.c.l.b16 %v78
    %v334 = vunpack.c.h.b16 %v78
    %v335 = vunpack.c.l.b16 %v79
    %v336 = vunpack.c.h.b16 %v79
    %v337 = vunpack.c.l.b16 %v80
    %v338 = vunpack.c.h.b16 %v80
    %v339 = vunpack.c.l.b16 %v81
    %v340 = vunpack.c.h.b16 %v81
    %v341 = vunpack.c.l.b16 %v82
    %v342 = vunpack.c.h.b16 %v82
    %v343 = vunpack.c.l.b16 %v83
    %v344 = vunpack.c.h.b16 %v83
    %v345 = vunpack.c.l.b16 %v84
    %v346 = vunpack.c.h.b16 %v84
    %v347 = vunpack.c.l.b16 %v85
    %v348 = vunpack.c.h.b16 %v85
    %v349 = vunpack.c.l.b16 %v86
    %v350 = vunpack.c.h.b16 %v86
    %v351 = vunpack.c.l.b16 %v87
    %v352 = vunpack.c.h.b16 %v87
    %v353 = vunpack.c.l.b16 %v88
    %v354 = vunpack.c.h.b16 %v88
    %v355 = vunpack.c.l.b16 %v89
    %v356 = vunpack.c.h.b16 %v89
    %v357 = vunpack.c.l.b16 %v90
    %v358 = vunpack.c.h.b16 %v90
    %v359 = vunpack.c.l.b16 %v91
    %v360 = vunpack.c.h.b16 %v91
    %v361 = vunpack.c.l.b16 %v92
    %v362 = vunpack.c.h.b16 %v92
    %v363 = vunpack.c.l.b16 %v93
    %v364 = vunpack.c.h.b16 %v93
    %v365 = vunpack.c.l.b16 %v94
    %v366 = vunpack.c.h.b16 %v94
    %v367 = vunpack.c.l.b16 %v95
    %v368 = vunpack.c.h.b16 %v95
    %v369 = vunpack.c.l.b16 %v96
    %v370 = vunpack.c.h.b16 %v96
    %v371 = vunpack.c.l.b16 %v97
    %v372 = vunpack.c.h.b16 %v97
    %v373 = vunpack.c.l.b16 %v98
    %v374 = vunpack.c.h.b16 %v98
    %v375 = vunpack.c.l.b16 %v99
    %v376 = vunpack.c.h.b16 %v99
    %v377 = vunpack.c.l.b16 %v100
    %v378 = vunpack.c.h.b16 %v100
    %v379 = vunpack.c.l.b16 %v101
    %v380 = vunpack.c.h.b16 %v101
    %v381 = vunpack.c.l.b16 %v102
    %v382 = vunpack.c.h.b16 %v102
    %v383 = vunpack.c.l.b16 %v103
    %v384 = vunpack.c.h.b16 %v103
    %v385 = vunpack.c.l.b16 %v104
    %v386 = vunpack.c.h.b16 %v104
    %v387 = vunpack.c.l.b16 %v105
    %v388 = vunpack.c.h.b16 %v105
    %v389 = vunpack.c.l.b16 %v106
    %v390 = vunpack.c.h.b16 %v106
    %v391 = vunpack.c.l.b16 %v107
    %v392 = vunpack.c.h.b16 %v107
    %v393 = vunpack.c.l.b16 %v108
    %v394 = vunpack.c.h.b16 %v108
    %v395 = vunpack.c.l.b16 %v109
    %v396 = vunpack.c.h.b16 %v109
    %v397 = vunpack.c.l.b16 %v110
    %v398 = vunpack.c.h.b16 %v110
    %v399 = vunpack.c.l.b16 %v111
    %v400 = vunpack.c.h.b16 %v111
    %v401 = vunpack.c.l.b16 %v112
    %v402 = vunpack.c.h.b16 %v112
    %v403 = vunpack.c.l.b16 %v113
    %v404 = vunpack.c.h.b16 %v113
    %v405 = vunpack.c.l.b16 %v114
    %v406 = vunpack.c.h.b16 %v114
    %v407 = vunpack.c.l.b16 %v115
    %v408 = vunpack.c.h.b16 %v115
    %v409 = vunpack.c.l.b16 %v116
    %v410 = vunpack.c.h.b16 %v116
    %v411 = vunpack.c.l.b16 %v117
    %v412 = vunpack.c.h.b16 %v117
    %v413 = vunpack.c.l.b16 %v118
    %v414 = vunpack.c.h.b16 %v118
    %v415 = vunpack.c.l.b16 %v119
    %v416 = vunpack.c.h.b16 %v119
    %v417 = vunpack.c.l.b16 %v120
    %v418 = vunpack.c.h.b16 %v120
    %v419 = vunpack.c.l.b16 %v121
    %v420 = vunpack.c.h.b16 %v121
    %v421 = vunpack.c.l.b16 %v122
    %v422 = vunpack.c.h.b16 %v122
    %v423 = vunpack.c.l.b16 %v123
    %v424 = vunpack.c.h.b16 %v123
    %v425 = vunpack.c.l.b16 %v124
    %v426 = vunpack.c.h.b16 %v124
    %v427 = vunpack.c.l.b16 %v125
    %v428 = vunpack.c.h.b16 %v125
    %v429 = vunpack.c.l.b16 %v126
    %v430 = vunpack.c.h.b16 %v126
    %v431 = vunpack.c.l.b16 %v127
    %v432 = vunpack.c.h.b16 %v127
    %v433 = vunpack.c.l.b16 %v128
    %v434 = vunpack.c.h.b16 %v128
    %v435 = vunpack.c.l.b16 %v129
    %v436 = vunpack.c.h.b16 %v129
    %v437 = vunpack.c.l.b16 %v130
    %v438 = vunpack.c.h.b16 %v130
    %v439 = vunpack.c.l.b16 %v131
    %v440 = vunpack.c.h.b16 %v131
    %v441 = vunpack.c.l.b16 %v132
    %v442 = vunpack.c.h.b16 %v132
    %v443 = vunpack.c.l.b16 %v133
    %v444 = vunpack.c.h.b16 %v133
    %v445 = vunpack.c.l.b16 %v134
    %v446 = vunpack.c.h.b16 %v134
    %v447 = vunpack.c.l.b16 %v135
    %v448 = vunpack.c.h.b16 %v135
    %v449 = vunpack.c.l.b16 %v136
    %v450 = vunpack.c.h.b16 %v136
    %v451 = vunpack.c.l.b16 %v137
    %v452 = vunpack.c.h.b16 %v137
    %v453 = vpack.c.b16 %v259, %v257
    %v454 = vpack.c.b16 %v260, %v258
    %v455 = vpack.c.b16 %v263, %v261
    %v456 = vpack.c.b16 %v264, %v262
    %v457 = vpack.c.b16 %v267, %v265
    %v458 = vpack.c.b16 %v268, %v266
    %v459 = vpack.c.b16 %v271, %v269
    %v460 = vpack.c.b16 %v272, %v270
    %v461 = vpack.c.b16 %v275, %v273
    %v462 = vpack.c.b16 %v276, %v274
    %v463 = vpack.c.b16 %v279, %v277
    %v464 = vpack.c.b16 %v280, %v278
    %v465 = vpack.c.b16 %v283, %v281
    %v466 = vpack.c.b16 %v284, %v282
    %v467 = vpack.c.b16 %v287, %v285
    %v468 = vpack.c.b16 %v288, %v286
    %v469 = vpack.c.b16 %v291, %v289
    %v470 = vpack.c.b16 %v292, %v290
    %v471 = vpack.c.b16 %v295, %v293
    %v472 = vpack.c.b16 %v296, %v294
    %v473 = vpack.c.b16 %v299, %v297
    %v474 = vpack.c.b16 %v300, %v298
    %v475 = vpack.c.b16 %v303, %v301
    %v476 = vpack.c.b16 %v304, %v302
    %v477 = vpack.c.b16 %v307, %v305
    %v478 = vpack.c.b16 %v308, %v306
    %v479 = vpack.c.b16 %v311, %v309
    %v480 = vpack.c.b16 %v312, %v310
    %v481 = vpack.c.b16 %v315, %v313
    %v482 = vpack.c.b16 %v316, %v314
    %v483 = vpack.c.b16 %v319, %v317
    %v484 = vpack.c.b16 %v320, %v318
    %v485 = vpack.c.b16 %v323, %v321
    %v486 = vpack.c.b16 %v324, %v322
    %v487 = vpack.c.b16 %v327, %v325
    %v488 = vpack.c.b16 %v328, %v326
    %v489 = vpack.c.b16 %v331, %v329
    %v490 = vpack.c.b16 %v332, %v330
    %v491 = vpack.c.b16 %v335, %v333
    %v492 = vpack.c.b16 %v336, %v334
    %v493 = vpack.c.b16 %v339, %v337
    %v494 = vpack.c.b16 %v340, %v338
    %v495 = vpack.c.b16 %v343, %v341
    %v496 = vpack.c.b16 %v344, %v342
    %v497 = vpack.c.b16 %v347, %v345
    %v498 = vpack.c.b16 %v348, %v346
    %v499 = vpack.c.b16 %v351, %v349
    %v500 = vpack.c.b16 %v352, %v350
    %v501 = vpack.c.b16 %v355, %v353
    %v502 = vpack.c.b16 %v356, %v354
    %v503 = vpack.c.b16 %v359, %v357
    %v504 = vpack.c.b16 %v360, %v358
    %v505 = vpack.c.b16 %v363, %v361
    %v506 = vpack.c.b16 %v364, %v362
    %v507 = vpack.c.b16 %v367, %v365
    %v508 = vpack.c.b16 %v368, %v366
    %v509 = vpack.c.b16 %v371, %v369
    %v510 = vpack.c.b16 %v372, %v370
    %v511 = vpack.c.b16 %v375, %v373
    %v512 = vpack.c.b16 %v376, %v374
    %v513 = vpack.c.b16 %v379, %v377
    %v514 = vpack.c.b16 %v380, %v378
    %v515 = vpack.c.b16 %v383, %v381
    %v516 = vpack.c.b16 %v384, %v382
    %v517 = vpack.c.b16 %v387, %v385
    %v518 = vpack.c.b16 %v388, %v386
    %v519 = vpack.c.b16 %v391, %v389
    %v520 = vpack.c.b16 %v392, %v390
    %v521 = vpack.c.b16 %v395, %v393
    %v522 = vpack.c.b16 %v396, %v394
    %v523 = vpack.c.b16 %v399, %v397
    %v524 = vpack.c.b16 %v400, %v398
    %v525 = vpack.c.b16 %v403, %v401
    %v526 = vpack.c.b16 %v404, %v402
    %v527 = vpack.c.b16 %v407, %v405
    %v528 = vpack.c.b16 %v408, %v406
    %v529 = vpack.c.b16 %v411, %v409
    %v530 = vpack.c.b16 %v412, %v410
    %v531 = vpack.c.b16 %v415, %v413
    %v532 = vpack.c.b16 %v416, %v414
    %v533 = vpack.c.b16 %v419, %v417
    %v534 = vpack.c.b16 %v420, %v418
    %v535 = vpack.c.b16 %v423, %v421
    %v536 = vpack.c.b16 %v424, %v422
    %v537 = vpack.c.b16 %v427, %v425
    %v538 = vpack.c.b16 %v428, %v426
    %v539 = vpack.c.b16 %v431, %v429
    %v540 = vpack.c.b16 %v432, %v430
    %v541 = vpack.c.b16 %v435, %v433
    %v542 = vpack.c.b16 %v436, %v434
    %v543 = vpack.c.b16 %v439, %v437
    %v544 = vpack.c.b16 %v440, %v438
    %v545 = vpack.c.b16 %v443, %v441
    %v546 = vpack.c.b16 %v444, %v442
    %v547 = vpack.c.b16 %v447, %v445
    %v548 = vpack.c.b16 %v448, %v446
    %v549 = vpack.c.b16 %v451, %v449
    %v550 = vpack.c.b16 %v452, %v450
    %vm649 = vcmask 130048
    %v650 = vsel %vm649, %v152, 0
    %652 = vmatpush.bf16.msra.mxu0 %v467
    %653 = vmatpush.bf16.msra.mxu0 %v465
    %654 = vmatpush.bf16.msra.mxu0 %v463
    %655 = vmatpush.bf16.msra.mxu0 %v461
    %656 = vmatpush.bf16.msra.mxu0 %v459
    %657 = vmatpush.bf16.msra.mxu0 %v457
    %658 = vmatpush.bf16.msra.mxu0 %v455
    %659 = vmatpush.bf16.msra.mxu0 %v453
    %660 = vmatmul.bf16.gmra.mxu0 %v146
    %v661 = vpop.f32.mrf.mxu0
    %v662 = vadd.f32 %v140, %v661
    %v663 = vpop.f32.mrf.mxu0
    %664 = vdwg.mxu0
    %665 = vmatpush.bf16.msra.mxu0 %v483
    %666 = vmatpush.bf16.msra.mxu0 %v481
    %667 = vmatpush.bf16.msra.mxu0 %v479
    %668 = vmatpush.bf16.msra.mxu0 %v477
    %669 = vmatpush.bf16.msra.mxu0 %v475
    %670 = vmatpush.bf16.msra.mxu0 %v473
    %671 = vmatpush.bf16.msra.mxu0 %v471
    %672 = vmatpush.bf16.msra.mxu0 %v469
    %673 = vmatmul.bf16.gmra.mxu0 %v147
    %v674 = vpop.f32.mrf.mxu0
    %v675 = vadd.f32 %v662, %v674
    %v676 = vpop.f32.mrf.mxu0
    %677 = vdwg.mxu0
    %678 = vmatpush.bf16.msra.mxu0 %v499
    %679 = vmatpush.bf16.msra.mxu0 %v497
    %680 = vmatpush.bf16.msra.mxu0 %v495
    %681 = vmatpush.bf16.msra.mxu0 %v493
    %682 = vmatpush.bf16.msra.mxu0 %v491
    %683 = vmatpush.bf16.msra.mxu0 %v489
    %684 = vmatpush.bf16.msra.mxu0 %v487
    %685 = vmatpush.bf16.msra.mxu0 %v485
    %686 = vmatmul.bf16.gmra.mxu0 %v148
    %v687 = vpop.f32.mrf.mxu0
    %v688 = vadd.f32 %v675, %v687
    %v689 = vpop.f32.mrf.mxu0
    %690 = vdwg.mxu0
    %691 = vmatpush.bf16.msra.mxu0 %v515
    %692 = vmatpush.bf16.msra.mxu0 %v513
    %693 = vmatpush.bf16.msra.mxu0 %v511
    %694 = vmatpush.bf16.msra.mxu0 %v509
    %695 = vmatpush.bf16.msra.mxu0 %v507
    %696 = vmatpush.bf16.msra.mxu0 %v505
    %697 = vmatpush.bf16.msra.mxu0 %v503
    %698 = vmatpush.bf16.msra.mxu0 %v501
    %699 = vmatmul.bf16.gmra.mxu0 %v149
    %v700 = vpop.f32.mrf.mxu0
    %v701 = vadd.f32 %v688, %v700
    %v702 = vpop.f32.mrf.mxu0
    %703 = vdwg.mxu0
    %704 = vmatpush.bf16.msra.mxu0 %v531
    %705 = vmatpush.bf16.msra.mxu0 %v529
    %706 = vmatpush.bf16.msra.mxu0 %v527
    %707 = vmatpush.bf16.msra.mxu0 %v525
    %708 = vmatpush.bf16.msra.mxu0 %v523
    %709 = vmatpush.bf16.msra.mxu0 %v521
    %710 = vmatpush.bf16.msra.mxu0 %v519
    %711 = vmatpush.bf16.msra.mxu0 %v517
    %712 = vmatmul.bf16.gmra.mxu0 %v150
    %v713 = vpop.f32.mrf.mxu0
    %v714 = vadd.f32 %v701, %v713
    %v715 = vpop.f32.mrf.mxu0
    %716 = vdwg.mxu0
    %717 = vmatpush.bf16.msra.mxu0 %v547
    %718 = vmatpush.bf16.msra.mxu0 %v545
    %719 = vmatpush.bf16.msra.mxu0 %v543
    %720 = vmatpush.bf16.msra.mxu0 %v541
    %721 = vmatpush.bf16.msra.mxu0 %v539
    %722 = vmatpush.bf16.msra.mxu0 %v537
    %723 = vmatpush.bf16.msra.mxu0 %v535
    %724 = vmatpush.bf16.msra.mxu0 %v533
    %725 = vmatmul.bf16.gmra.mxu0 %v151
    %v726 = vpop.f32.mrf.mxu0
    %v727 = vadd.f32 %v714, %v726
    %v728 = vpop.f32.mrf.mxu0
    %729 = vdwg.mxu0
    %730 = vmatpush.bf16.msra.mxu0 0
    %731 = vmatpush.bf16.msra.mxu0 0
    %732 = vmatpush.bf16.msra.mxu0 0
    %733 = vmatpush.bf16.msra.mxu0 0
    %734 = vmatpush.bf16.msra.mxu0 0
    %735 = vmatpush.bf16.msra.mxu0 0
    %736 = vmatpush.bf16.msra.mxu0 0
    %737 = vmatpush.bf16.msra.mxu0 %v549
    %738 = vmatmul.bf16.gmra.mxu0 %v650
    %v739 = vpop.f32.mrf.mxu0
    %v740 = vadd.f32 %v727, %v739
    %v741 = vpop.f32.mrf.mxu0
    %742 = vdwg.mxu0
    %743 = vmatpush.bf16.msra.mxu0 %v468
    %744 = vmatpush.bf16.msra.mxu0 %v466
    %745 = vmatpush.bf16.msra.mxu0 %v464
    %746 = vmatpush.bf16.msra.mxu0 %v462
    %747 = vmatpush.bf16.msra.mxu0 %v460
    %748 = vmatpush.bf16.msra.mxu0 %v458
    %749 = vmatpush.bf16.msra.mxu0 %v456
    %750 = vmatpush.bf16.msra.mxu0 %v454
    %751 = vmatmul.bf16.gmra.mxu0 %v146
    %v752 = vpop.f32.mrf.mxu0
    %v753 = vadd.f32 %v141, %v752
    %v754 = vpop.f32.mrf.mxu0
    %755 = vdwg.mxu0
    %756 = vmatpush.bf16.msra.mxu0 %v484
    %757 = vmatpush.bf16.msra.mxu0 %v482
    %758 = vmatpush.bf16.msra.mxu0 %v480
    %759 = vmatpush.bf16.msra.mxu0 %v478
    %760 = vmatpush.bf16.msra.mxu0 %v476
    %761 = vmatpush.bf16.msra.mxu0 %v474
    %762 = vmatpush.bf16.msra.mxu0 %v472
    %763 = vmatpush.bf16.msra.mxu0 %v470
    %764 = vmatmul.bf16.gmra.mxu0 %v147
    %v765 = vpop.f32.mrf.mxu0
    %v766 = vadd.f32 %v753, %v765
    %v767 = vpop.f32.mrf.mxu0
    %768 = vdwg.mxu0
    %769 = vmatpush.bf16.msra.mxu0 %v500
    %770 = vmatpush.bf16.msra.mxu0 %v498
    %771 = vmatpush.bf16.msra.mxu0 %v496
    %772 = vmatpush.bf16.msra.mxu0 %v494
    %773 = vmatpush.bf16.msra.mxu0 %v492
    %774 = vmatpush.bf16.msra.mxu0 %v490
    %775 = vmatpush.bf16.msra.mxu0 %v488
    %776 = vmatpush.bf16.msra.mxu0 %v486
    %777 = vmatmul.bf16.gmra.mxu0 %v148
    %v778 = vpop.f32.mrf.mxu0
    %v779 = vadd.f32 %v766, %v778
    %v780 = vpop.f32.mrf.mxu0
    %781 = vdwg.mxu0
    %782 = vmatpush.bf16.msra.mxu0 %v516
    %783 = vmatpush.bf16.msra.mxu0 %v514
    %784 = vmatpush.bf16.msra.mxu0 %v512
    %785 = vmatpush.bf16.msra.mxu0 %v510
    %786 = vmatpush.bf16.msra.mxu0 %v508
    %787 = vmatpush.bf16.msra.mxu0 %v506
    %788 = vmatpush.bf16.msra.mxu0 %v504
    %789 = vmatpush.bf16.msra.mxu0 %v502
    %790 = vmatmul.bf16.gmra.mxu0 %v149
    %v791 = vpop.f32.mrf.mxu0
    %v792 = vadd.f32 %v779, %v791
    %v793 = vpop.f32.mrf.mxu0
    %794 = vdwg.mxu0
    %795 = vmatpush.bf16.msra.mxu0 %v532
    %796 = vmatpush.bf16.msra.mxu0 %v530
    %797 = vmatpush.bf16.msra.mxu0 %v528
    %798 = vmatpush.bf16.msra.mxu0 %v526
    %799 = vmatpush.bf16.msra.mxu0 %v524
    %800 = vmatpush.bf16.msra.mxu0 %v522
    %801 = vmatpush.bf16.msra.mxu0 %v520
    %802 = vmatpush.bf16.msra.mxu0 %v518
    %803 = vmatmul.bf16.gmra.mxu0 %v150
    %v804 = vpop.f32.mrf.mxu0
    %v805 = vadd.f32 %v792, %v804
    %v806 = vpop.f32.mrf.mxu0
    %807 = vdwg.mxu0
    %808 = vmatpush.bf16.msra.mxu0 %v548
    %809 = vmatpush.bf16.msra.mxu0 %v546
    %810 = vmatpush.bf16.msra.mxu0 %v544
    %811 = vmatpush.bf16.msra.mxu0 %v542
    %812 = vmatpush.bf16.msra.mxu0 %v540
    %813 = vmatpush.bf16.msra.mxu0 %v538
    %814 = vmatpush.bf16.msra.mxu0 %v536
    %815 = vmatpush.bf16.msra.mxu0 %v534
    %816 = vmatmul.bf16.gmra.mxu0 %v151
    %v817 = vpop.f32.mrf.mxu0
    %v818 = vadd.f32 %v805, %v817
    %v819 = vpop.f32.mrf.mxu0
    %820 = vdwg.mxu0
    %821 = vmatpush.bf16.msra.mxu0 0
    %822 = vmatpush.bf16.msra.mxu0 0
    %823 = vmatpush.bf16.msra.mxu0 0
    %824 = vmatpush.bf16.msra.mxu0 0
    %825 = vmatpush.bf16.msra.mxu0 0
    %826 = vmatpush.bf16.msra.mxu0 0
    %827 = vmatpush.bf16.msra.mxu0 0
    %828 = vmatpush.bf16.msra.mxu0 %v550
    %829 = vmatmul.bf16.gmra.mxu0 %v650
    %v830 = vpop.f32.mrf.mxu0
    %v831 = vadd.f32 %v818, %v830
    %v832 = vpop.f32.mrf.mxu0
    %833 = vdwg.mxu0
    %v834 = vmax.f32 %v740, 0.0
    %v835 = vmax.f32 %v831, 0.0
    %v836 = vpack.c.bf16 %v835, %v834
    %v838 = vrot.slane %v836, 3
    %vm839 = vcmask 1040384
    %v842 = vsel %vm839, %v836, %v838
    %844 = vst [vmem:[#allocation2] sm:$0x3] %v842
    %v845 = vld [vmem:[%s3] sm:$0xf]
    %v846 = vld [vmem:[%s3 + $0x4] sm:$0xf]
    %v847 = vld [vmem:[%s3 + $0x8] sm:$0xf]
    %v848 = vld [vmem:[%s3 + $0xc] sm:$0xf]
    %v849 = vld [vmem:[%s3 + $0x10] sm:$0xf]
    %v850 = vld [vmem:[%s3 + $0x14] sm:$0xf]
    %v851 = vld [vmem:[%s3 + $0x18] sm:$0xf]
    %v852 = vld [vmem:[%s3 + $0x1c] sm:$0xf]
    %v853 = vld [vmem:[%s3 + $0x20] sm:$0xf]
    %v854 = vld [vmem:[%s3 + $0x24] sm:$0xf]
    %v855 = vld [vmem:[%s3 + $0x28] sm:$0xf]
    %v856 = vld [vmem:[%s3 + $0x2c] sm:$0xf]
    %v857 = vld [vmem:[%s3 + $0x30] sm:$0xf]
    %v858 = vld [vmem:[%s3 + $0x34] sm:$0xf]
    %v859 = vld [vmem:[%s3 + $0x38] sm:$0xf]
    %v860 = vld [vmem:[%s3 + $0x3c] sm:$0xf]
    %v861 = vld [vmem:[%s3 + $0x40] sm:$0xf]
    %v862 = vld [vmem:[%s3 + $0x44] sm:$0xf]
    %v863 = vld [vmem:[%s3 + $0x48] sm:$0xf]
    %v864 = vld [vmem:[%s3 + $0x4c] sm:$0xf]
    %v865 = vld [vmem:[%s3 + $0x50] sm:$0xf]
    %v866 = vld [vmem:[%s3 + $0x54] sm:$0xf]
    %v867 = vld [vmem:[%s3 + $0x58] sm:$0xf]
    %v868 = vld [vmem:[%s3 + $0x5c] sm:$0xf]
    %v869 = vld [vmem:[%s3 + $0x60] sm:$0xf]
    %v870 = vld [vmem:[%s3 + $0x64] sm:$0xf]
    %v871 = vld [vmem:[%s3 + $0x68] sm:$0xf]
    %v872 = vld [vmem:[%s3 + $0x6c] sm:$0xf]
    %v873 = vld [vmem:[%s3 + $0x70] sm:$0xf]
    %v874 = vld [vmem:[%s3 + $0x74] sm:$0xf]
    %v875 = vld [vmem:[%s3 + $0x78] sm:$0xf]
    %v876 = vld [vmem:[%s3 + $0x7c] sm:$0xf]
    %v877 = vld [vmem:[%s4] sm:$0x1]
    %v879 = vperm.slane %v877, 0
    %v881 = vunpack.c.l.b16 %v836
    %v882 = vunpack.c.h.b16 %v836
    %v883 = vpack.c.b16 %v881, %v881
    %v884 = vpack.c.b16 %v882, %v882
    %v919 = vunpack.c.l.b16 %v845
    %v920 = vunpack.c.l.b16 %v846
    %v921 = vunpack.c.l.b16 %v847
    %v922 = vunpack.c.l.b16 %v848
    %v923 = vunpack.c.l.b16 %v849
    %v924 = vunpack.c.l.b16 %v850
    %v925 = vunpack.c.l.b16 %v851
    %v926 = vunpack.c.l.b16 %v852
    %v927 = vunpack.c.l.b16 %v853
    %v928 = vunpack.c.l.b16 %v854
    %v929 = vunpack.c.l.b16 %v855
    %v930 = vunpack.c.l.b16 %v856
    %v931 = vunpack.c.l.b16 %v857
    %v932 = vunpack.c.l.b16 %v858
    %v933 = vunpack.c.l.b16 %v859
    %v934 = vunpack.c.l.b16 %v860
    %v935 = vunpack.c.l.b16 %v861
    %v936 = vunpack.c.l.b16 %v862
    %v937 = vunpack.c.l.b16 %v863
    %v938 = vunpack.c.l.b16 %v864
    %v939 = vunpack.c.l.b16 %v865
    %v940 = vunpack.c.l.b16 %v866
    %v941 = vunpack.c.l.b16 %v867
    %v942 = vunpack.c.l.b16 %v868
    %v943 = vunpack.c.l.b16 %v869
    %v944 = vunpack.c.l.b16 %v870
    %v945 = vunpack.c.l.b16 %v871
    %v946 = vunpack.c.l.b16 %v872
    %v947 = vunpack.c.l.b16 %v873
    %v948 = vunpack.c.l.b16 %v874
    %v949 = vunpack.c.l.b16 %v875
    %v950 = vunpack.c.l.b16 %v876
    %v951 = vpack.c.b16 %v920, %v919
    %v952 = vpack.c.b16 %v922, %v921
    %v953 = vpack.c.b16 %v924, %v923
    %v954 = vpack.c.b16 %v926, %v925
    %v955 = vpack.c.b16 %v928, %v927
    %v956 = vpack.c.b16 %v930, %v929
    %v957 = vpack.c.b16 %v932, %v931
    %v958 = vpack.c.b16 %v934, %v933
    %v959 = vpack.c.b16 %v936, %v935
    %v960 = vpack.c.b16 %v938, %v937
    %v961 = vpack.c.b16 %v940, %v939
    %v962 = vpack.c.b16 %v942, %v941
    %v963 = vpack.c.b16 %v944, %v943
    %v964 = vpack.c.b16 %v946, %v945
    %v965 = vpack.c.b16 %v948, %v947
    %v966 = vpack.c.b16 %v950, %v949
    %983 = vmatpush.bf16.msra.mxu0 %v958
    %984 = vmatpush.bf16.msra.mxu0 %v957
    %985 = vmatpush.bf16.msra.mxu0 %v956
    %986 = vmatpush.bf16.msra.mxu0 %v955
    %987 = vmatpush.bf16.msra.mxu0 %v954
    %988 = vmatpush.bf16.msra.mxu0 %v953
    %989 = vmatpush.bf16.msra.mxu0 %v952
    %990 = vmatpush.bf16.msra.mxu0 %v951
    %991 = vmatmul.bf16.gmra.mxu0 %v883
    %v992 = vpop.f32.mrf.mxu0
    %v993 = vadd.f32 %v879, %v992
    %v994 = vpop.f32.mrf.mxu0
    %995 = vdwg.mxu0
    %996 = vmatpush.bf16.msra.mxu0 %v966
    %997 = vmatpush.bf16.msra.mxu0 %v965
    %998 = vmatpush.bf16.msra.mxu0 %v964
    %999 = vmatpush.bf16.msra.mxu0 %v963
    %1000 = vmatpush.bf16.msra.mxu0 %v962
    %1001 = vmatpush.bf16.msra.mxu0 %v961
    %1002 = vmatpush.bf16.msra.mxu0 %v960
    %1003 = vmatpush.bf16.msra.mxu0 %v959
    %1004 = vmatmul.bf16.gmra.mxu0 %v884
    %v1005 = vpop.f32.mrf.mxu0
    %v1006 = vadd.f32 %v993, %v1005
    %v1007 = vpop.f32.mrf.mxu0
    %1008 = vdwg.mxu0
    %vm1009 = vcmask 74752
    %1010 = vst.msk [vmem:[%s10] sm:$0x3] %vm1009, %v1006
    %v1011 = vld [vmem:[%s5] sm:$0xff]
    %v1012 = vld [vmem:[%s5 + $0x8] sm:$0x11]
    %v1013 = vld [vmem:[%s6] sm:$0x3]
    %v1014 = vpack.c.bf16 %v1006, %v1006
    %v1016 = vperm.slane %v1013, 0
    %v1017 = vperm.slane %v1013, 1
    %v1022 = vunpack.c.l.b16 %v1011
    %v1023 = vunpack.c.h.b16 %v1011
    %v1024 = vunpack.c.l.b16 %v1012
    %v1025 = vunpack.c.h.b16 %v1012
    %v1026 = vpack.c.b16 %v1024, %v1022
    %v1027 = vpack.c.b16 %v1025, %v1023
    %vm1028 = vcmask 80896
    %v1030 = vsel %vm1028, %v1014, 0
    %vm1032 = vcmask 1044480
    %v1034 = vsel %vm1032, %v1026, 0
    %v1037 = vsel %vm1032, %v1027, 0
    %1039 = vmatpush.bf16.msra.mxu0 0
    %1040 = vmatpush.bf16.msra.mxu0 0
    %1041 = vmatpush.bf16.msra.mxu0 0
    %1042 = vmatpush.bf16.msra.mxu0 0
    %1043 = vmatpush.bf16.msra.mxu0 0
    %1044 = vmatpush.bf16.msra.mxu0 0
    %1045 = vmatpush.bf16.msra.mxu0 0
    %1046 = vmatpush.bf16.msra.mxu0 %v1034
    %1047 = vmatmul.bf16.gmra.mxu0 %v1030
    %v1048 = vpop.f32.mrf.mxu0
    %v1049 = vadd.f32 %v1016, %v1048
    %v1050 = vpop.f32.mrf.mxu0
    %1051 = vdwg.mxu0
    %1052 = vmatpush.bf16.msra.mxu0 0
    %1053 = vmatpush.bf16.msra.mxu0 0
    %1054 = vmatpush.bf16.msra.mxu0 0
    %1055 = vmatpush.bf16.msra.mxu0 0
    %1056 = vmatpush.bf16.msra.mxu0 0
    %1057 = vmatpush.bf16.msra.mxu0 0
    %1058 = vmatpush.bf16.msra.mxu0 0
    %1059 = vmatpush.bf16.msra.mxu0 %v1037
    %1060 = vmatmul.bf16.gmra.mxu0 %v1030
    %v1061 = vpop.f32.mrf.mxu0
    %v1062 = vadd.f32 %v1017, %v1061
    %v1063 = vpop.f32.mrf.mxu0
    %1064 = vdwg.mxu0
    %v1065 = vmax.f32 %v1049, 0.0
    %v1066 = vmax.f32 %v1062, 0.0
    %v1067 = vpack.c.bf16 %v1066, %v1065
    %v1069 = vrot.slane %v1067, 3
    %v1072 = vsel %vm839, %v1067, %v1069
    %1074 = vst [vmem:[#allocation4] sm:$0x3] %v1072
    %v1075 = vld [vmem:[%s7] sm:$0xff]
    %v1076 = vld [vmem:[%s7 + $0x8] sm:$0xff]
    %v1077 = vld [vmem:[%s7 + $0x10] sm:$0xff]
    %v1078 = vld [vmem:[%s7 + $0x18] sm:$0xf]
    %v1079 = vld [vmem:[%s7 + $0x1c] sm:$0xff]
    %v1080 = vld [vmem:[%s7 + $0x24] sm:$0xff]
    %v1081 = vld [vmem:[%s7 + $0x2c] sm:$0xff]
    %v1082 = vld [vmem:[%s7 + $0x34] sm:$0xf]
    %v1083 = vld [vmem:[%s7 + $0x38] sm:$0xff]
    %v1084 = vld [vmem:[%s7 + $0x40] sm:$0xff]
    %v1085 = vld [vmem:[%s7 + $0x48] sm:$0xff]
    %v1086 = vld [vmem:[%s7 + $0x50] sm:$0xf]
    %v1087 = vld [vmem:[%s7 + $0x54] sm:$0xff]
    %v1088 = vld [vmem:[%s7 + $0x5c] sm:$0xff]
    %v1089 = vld [vmem:[%s7 + $0x64] sm:$0xff]
    %v1090 = vld [vmem:[%s7 + $0x6c] sm:$0xf]
    %v1091 = vld [vmem:[%s7 + $0x70] sm:$0xff]
    %v1092 = vld [vmem:[%s7 + $0x78] sm:$0xff]
    %v1093 = vld [vmem:[%s7 + $0x80] sm:$0xff]
    %v1094 = vld [vmem:[%s7 + $0x88] sm:$0xf]
    %v1095 = vld [vmem:[%s7 + $0x8c] sm:$0xff]
    %v1096 = vld [vmem:[%s7 + $0x94] sm:$0xff]
    %v1097 = vld [vmem:[%s7 + $0x9c] sm:$0xff]
    %v1098 = vld [vmem:[%s7 + $0xa4] sm:$0xf]
    %v1099 = vld [vmem:[%s7 + $0xa8] sm:$0xff]
    %v1100 = vld [vmem:[%s7 + $0xb0] sm:$0xff]
    %v1101 = vld [vmem:[%s7 + $0xb8] sm:$0xff]
    %v1102 = vld [vmem:[%s7 + $0xc0] sm:$0xf]
    %v1103 = vld [vmem:[%s7 + $0xc4] sm:$0xff]
    %v1104 = vld [vmem:[%s7 + $0xcc] sm:$0xff]
    %v1105 = vld [vmem:[%s7 + $0xd4] sm:$0xff]
    %v1106 = vld [vmem:[%s7 + $0xdc] sm:$0xf]
    %v1107 = vld [vmem:[%s7 + $0xe0] sm:$0xff]
    %v1108 = vld [vmem:[%s7 + $0xe8] sm:$0xff]
    %v1109 = vld [vmem:[%s7 + $0xf0] sm:$0xff]
    %v1110 = vld [vmem:[%s7 + $0xf8] sm:$0xf]
    %v1111 = vld [vmem:[%s7 + $0xfc] sm:$0xff]
    %v1112 = vld [vmem:[%s7 + $0x104] sm:$0xff]
    %v1113 = vld [vmem:[%s7 + $0x10c] sm:$0xff]
    %v1114 = vld [vmem:[%s7 + $0x114] sm:$0xf]
    %v1115 = vld [vmem:[%s7 + $0x118] sm:$0xff]
    %v1116 = vld [vmem:[%s7 + $0x120] sm:$0xff]
    %v1117 = vld [vmem:[%s7 + $0x128] sm:$0xff]
    %v1118 = vld [vmem:[%s7 + $0x130] sm:$0xf]
    %v1119 = vld [vmem:[%s7 + $0x134] sm:$0xff]
    %v1120 = vld [vmem:[%s7 + $0x13c] sm:$0xff]
    %v1121 = vld [vmem:[%s7 + $0x144] sm:$0xff]
    %v1122 = vld [vmem:[%s7 + $0x14c] sm:$0xf]
    %v1123 = vld [vmem:[%s7 + $0x150] sm:$0xff]
    %v1124 = vld [vmem:[%s7 + $0x158] sm:$0xff]
    %v1125 = vld [vmem:[%s7 + $0x160] sm:$0xff]
    %v1126 = vld [vmem:[%s7 + $0x168] sm:$0xf]
    %v1127 = vld [vmem:[%s7 + $0x16c] sm:$0xff]
    %v1128 = vld [vmem:[%s7 + $0x174] sm:$0xff]
    %v1129 = vld [vmem:[%s7 + $0x17c] sm:$0xff]
    %v1130 = vld [vmem:[%s7 + $0x184] sm:$0xf]
    %v1131 = vld [vmem:[%s7 + $0x188] sm:$0xff]
    %v1132 = vld [vmem:[%s7 + $0x190] sm:$0xff]
    %v1133 = vld [vmem:[%s7 + $0x198] sm:$0xff]
    %v1134 = vld [vmem:[%s7 + $0x1a0] sm:$0xf]
    %v1135 = vld [vmem:[%s7 + $0x1a4] sm:$0xff]
    %v1136 = vld [vmem:[%s7 + $0x1ac] sm:$0xff]
    %v1137 = vld [vmem:[%s7 + $0x1b4] sm:$0xff]
    %v1138 = vld [vmem:[%s7 + $0x1bc] sm:$0xf]
    %v1139 = vld [vmem:[%s7 + $0x1c0] sm:$0xff]
    %v1140 = vld [vmem:[%s7 + $0x1c8] sm:$0xff]
    %v1141 = vld [vmem:[%s7 + $0x1d0] sm:$0xff]
    %v1142 = vld [vmem:[%s7 + $0x1d8] sm:$0xf]
    %v1143 = vld [vmem:[%s7 + $0x1dc] sm:$0xff]
    %v1144 = vld [vmem:[%s7 + $0x1e4] sm:$0xff]
    %v1145 = vld [vmem:[%s7 + $0x1ec] sm:$0xff]
    %v1146 = vld [vmem:[%s7 + $0x1f4] sm:$0xf]
    %v1147 = vld [vmem:[%s7 + $0x1f8] sm:$0xff]
    %v1148 = vld [vmem:[%s7 + $0x200] sm:$0xff]
    %v1149 = vld [vmem:[%s7 + $0x208] sm:$0xff]
    %v1150 = vld [vmem:[%s7 + $0x210] sm:$0xf]
    %v1151 = vld [vmem:[%s7 + $0x214] sm:$0xff]
    %v1152 = vld [vmem:[%s7 + $0x21c] sm:$0xff]
    %v1153 = vld [vmem:[%s7 + $0x224] sm:$0xff]
    %v1154 = vld [vmem:[%s7 + $0x22c] sm:$0xf]
    %v1155 = vld [vmem:[%s7 + $0x230] sm:$0xff]
    %v1156 = vld [vmem:[%s7 + $0x238] sm:$0xff]
    %v1157 = vld [vmem:[%s7 + $0x240] sm:$0xff]
    %v1158 = vld [vmem:[%s7 + $0x248] sm:$0xf]
    %v1159 = vld [vmem:[%s7 + $0x24c] sm:$0xff]
    %v1160 = vld [vmem:[%s7 + $0x254] sm:$0xff]
    %v1161 = vld [vmem:[%s7 + $0x25c] sm:$0xff]
    %v1162 = vld [vmem:[%s7 + $0x264] sm:$0xf]
    %v1163 = vld [vmem:[%s7 + $0x268] sm:$0xff]
    %v1164 = vld [vmem:[%s7 + $0x270] sm:$0xff]
    %v1165 = vld [vmem:[%s7 + $0x278] sm:$0xff]
    %v1166 = vld [vmem:[%s7 + $0x280] sm:$0xf]
    %v1167 = vld [vmem:[%s7 + $0x284] sm:$0xff]
    %v1168 = vld [vmem:[%s7 + $0x28c] sm:$0xff]
    %v1169 = vld [vmem:[%s7 + $0x294] sm:$0xff]
    %v1170 = vld [vmem:[%s7 + $0x29c] sm:$0xf]
    %v1171 = vld [vmem:[%s7 + $0x2a0] sm:$0xff]
    %v1172 = vld [vmem:[%s7 + $0x2a8] sm:$0xff]
    %v1173 = vld [vmem:[%s7 + $0x2b0] sm:$0xff]
    %v1174 = vld [vmem:[%s7 + $0x2b8] sm:$0xf]
    %v1175 = vld [vmem:[%s7 + $0x2bc] sm:$0xff]
    %v1176 = vld [vmem:[%s7 + $0x2c4] sm:$0xff]
    %v1177 = vld [vmem:[%s7 + $0x2cc] sm:$0xff]
    %v1178 = vld [vmem:[%s7 + $0x2d4] sm:$0xf]
    %v1179 = vld [vmem:[%s7 + $0x2d8] sm:$0xff]
    %v1180 = vld [vmem:[%s7 + $0x2e0] sm:$0xff]
    %v1181 = vld [vmem:[%s7 + $0x2e8] sm:$0xff]
    %v1182 = vld [vmem:[%s7 + $0x2f0] sm:$0xf]
    %v1183 = vld [vmem:[%s7 + $0x2f4] sm:$0xff]
    %v1184 = vld [vmem:[%s7 + $0x2fc] sm:$0xff]
    %v1185 = vld [vmem:[%s7 + $0x304] sm:$0xff]
    %v1186 = vld [vmem:[%s7 + $0x30c] sm:$0xf]
    %v1187 = vld [vmem:[%s7 + $0x310] sm:$0xff]
    %v1188 = vld [vmem:[%s7 + $0x318] sm:$0xff]
    %v1189 = vld [vmem:[%s7 + $0x320] sm:$0xff]
    %v1190 = vld [vmem:[%s7 + $0x328] sm:$0xf]
    %v1191 = vld [vmem:[%s7 + $0x32c] sm:$0xff]
    %v1192 = vld [vmem:[%s7 + $0x334] sm:$0xff]
    %v1193 = vld [vmem:[%s7 + $0x33c] sm:$0xff]
    %v1194 = vld [vmem:[%s7 + $0x344] sm:$0xf]
    %v1195 = vld [vmem:[%s7 + $0x348] sm:$0xff]
    %v1196 = vld [vmem:[%s7 + $0x350] sm:$0xff]
    %v1197 = vld [vmem:[%s7 + $0x358] sm:$0xff]
    %v1198 = vld [vmem:[%s7 + $0x360] sm:$0xf]
    %v1199 = vld [vmem:[%s7 + $0x364] sm:$0xff]
    %v1200 = vld [vmem:[%s7 + $0x36c] sm:$0xff]
    %v1201 = vld [vmem:[%s7 + $0x374] sm:$0xff]
    %v1202 = vld [vmem:[%s7 + $0x37c] sm:$0xf]
    %v1203 = vld [vmem:[%s8] sm:$0x7f]
    %v1205 = vperm.slane %v1203, 0
    %v1206 = vperm.slane %v1203, 1
    %v1207 = vperm.slane %v1203, 2
    %v1208 = vperm.slane %v1203, 3
    %v1209 = vperm.slane %v1203, 4
    %v1210 = vperm.slane %v1203, 5
    %v1211 = vperm.slane %v1203, 6
    %v1219 = vunpack.c.l.b16 %v1067
    %v1220 = vunpack.c.h.b16 %v1067
    %v1221 = vpack.c.b16 %v1219, %v1219
    %v1222 = vpack.c.b16 %v1220, %v1220
    %v1353 = vunpack.c.l.b16 %v1075
    %v1354 = vunpack.c.h.b16 %v1075
    %v1355 = vunpack.c.l.b16 %v1076
    %v1356 = vunpack.c.h.b16 %v1076
    %v1357 = vunpack.c.l.b16 %v1077
    %v1358 = vunpack.c.h.b16 %v1077
    %v1359 = vunpack.c.l.b16 %v1078
    %v1360 = vunpack.c.l.b16 %v1079
    %v1361 = vunpack.c.h.b16 %v1079
    %v1362 = vunpack.c.l.b16 %v1080
    %v1363 = vunpack.c.h.b16 %v1080
    %v1364 = vunpack.c.l.b16 %v1081
    %v1365 = vunpack.c.h.b16 %v1081
    %v1366 = vunpack.c.l.b16 %v1082
    %v1367 = vunpack.c.l.b16 %v1083
    %v1368 = vunpack.c.h.b16 %v1083
    %v1369 = vunpack.c.l.b16 %v1084
    %v1370 = vunpack.c.h.b16 %v1084
    %v1371 = vunpack.c.l.b16 %v1085
    %v1372 = vunpack.c.h.b16 %v1085
    %v1373 = vunpack.c.l.b16 %v1086
    %v1374 = vunpack.c.l.b16 %v1087
    %v1375 = vunpack.c.h.b16 %v1087
    %v1376 = vunpack.c.l.b16 %v1088
    %v1377 = vunpack.c.h.b16 %v1088
    %v1378 = vunpack.c.l.b16 %v1089
    %v1379 = vunpack.c.h.b16 %v1089
    %v1380 = vunpack.c.l.b16 %v1090
    %v1381 = vunpack.c.l.b16 %v1091
    %v1382 = vunpack.c.h.b16 %v1091
    %v1383 = vunpack.c.l.b16 %v1092
    %v1384 = vunpack.c.h.b16 %v1092
    %v1385 = vunpack.c.l.b16 %v1093
    %v1386 = vunpack.c.h.b16 %v1093
    %v1387 = vunpack.c.l.b16 %v1094
    %v1388 = vunpack.c.l.b16 %v1095
    %v1389 = vunpack.c.h.b16 %v1095
    %v1390 = vunpack.c.l.b16 %v1096
    %v1391 = vunpack.c.h.b16 %v1096
    %v1392 = vunpack.c.l.b16 %v1097
    %v1393 = vunpack.c.h.b16 %v1097
    %v1394 = vunpack.c.l.b16 %v1098
    %v1395 = vunpack.c.l.b16 %v1099
    %v1396 = vunpack.c.h.b16 %v1099
    %v1397 = vunpack.c.l.b16 %v1100
    %v1398 = vunpack.c.h.b16 %v1100
    %v1399 = vunpack.c.l.b16 %v1101
    %v1400 = vunpack.c.h.b16 %v1101
    %v1401 = vunpack.c.l.b16 %v1102
    %v1402 = vunpack.c.l.b16 %v1103
    %v1403 = vunpack.c.h.b16 %v1103
    %v1404 = vunpack.c.l.b16 %v1104
    %v1405 = vunpack.c.h.b16 %v1104
    %v1406 = vunpack.c.l.b16 %v1105
    %v1407 = vunpack.c.h.b16 %v1105
    %v1408 = vunpack.c.l.b16 %v1106
    %v1409 = vunpack.c.l.b16 %v1107
    %v1410 = vunpack.c.h.b16 %v1107
    %v1411 = vunpack.c.l.b16 %v1108
    %v1412 = vunpack.c.h.b16 %v1108
    %v1413 = vunpack.c.l.b16 %v1109
    %v1414 = vunpack.c.h.b16 %v1109
    %v1415 = vunpack.c.l.b16 %v1110
    %v1416 = vunpack.c.l.b16 %v1111
    %v1417 = vunpack.c.h.b16 %v1111
    %v1418 = vunpack.c.l.b16 %v1112
    %v1419 = vunpack.c.h.b16 %v1112
    %v1420 = vunpack.c.l.b16 %v1113
    %v1421 = vunpack.c.h.b16 %v1113
    %v1422 = vunpack.c.l.b16 %v1114
    %v1423 = vunpack.c.l.b16 %v1115
    %v1424 = vunpack.c.h.b16 %v1115
    %v1425 = vunpack.c.l.b16 %v1116
    %v1426 = vunpack.c.h.b16 %v1116
    %v1427 = vunpack.c.l.b16 %v1117
    %v1428 = vunpack.c.h.b16 %v1117
    %v1429 = vunpack.c.l.b16 %v1118
    %v1430 = vunpack.c.l.b16 %v1119
    %v1431 = vunpack.c.h.b16 %v1119
    %v1432 = vunpack.c.l.b16 %v1120
    %v1433 = vunpack.c.h.b16 %v1120
    %v1434 = vunpack.c.l.b16 %v1121
    %v1435 = vunpack.c.h.b16 %v1121
    %v1436 = vunpack.c.l.b16 %v1122
    %v1437 = vunpack.c.l.b16 %v1123
    %v1438 = vunpack.c.h.b16 %v1123
    %v1439 = vunpack.c.l.b16 %v1124
    %v1440 = vunpack.c.h.b16 %v1124
    %v1441 = vunpack.c.l.b16 %v1125
    %v1442 = vunpack.c.h.b16 %v1125
    %v1443 = vunpack.c.l.b16 %v1126
    %v1444 = vunpack.c.l.b16 %v1127
    %v1445 = vunpack.c.h.b16 %v1127
    %v1446 = vunpack.c.l.b16 %v1128
    %v1447 = vunpack.c.h.b16 %v1128
    %v1448 = vunpack.c.l.b16 %v1129
    %v1449 = vunpack.c.h.b16 %v1129
    %v1450 = vunpack.c.l.b16 %v1130
    %v1451 = vunpack.c.l.b16 %v1131
    %v1452 = vunpack.c.h.b16 %v1131
    %v1453 = vunpack.c.l.b16 %v1132
    %v1454 = vunpack.c.h.b16 %v1132
    %v1455 = vunpack.c.l.b16 %v1133
    %v1456 = vunpack.c.h.b16 %v1133
    %v1457 = vunpack.c.l.b16 %v1134
    %v1458 = vunpack.c.l.b16 %v1135
    %v1459 = vunpack.c.h.b16 %v1135
    %v1460 = vunpack.c.l.b16 %v1136
    %v1461 = vunpack.c.h.b16 %v1136
    %v1462 = vunpack.c.l.b16 %v1137
    %v1463 = vunpack.c.h.b16 %v1137
    %v1464 = vunpack.c.l.b16 %v1138
    %v1465 = vunpack.c.l.b16 %v1139
    %v1466 = vunpack.c.h.b16 %v1139
    %v1467 = vunpack.c.l.b16 %v1140
    %v1468 = vunpack.c.h.b16 %v1140
    %v1469 = vunpack.c.l.b16 %v1141
    %v1470 = vunpack.c.h.b16 %v1141
    %v1471 = vunpack.c.l.b16 %v1142
    %v1472 = vunpack.c.l.b16 %v1143
    %v1473 = vunpack.c.h.b16 %v1143
    %v1474 = vunpack.c.l.b16 %v1144
    %v1475 = vunpack.c.h.b16 %v1144
    %v1476 = vunpack.c.l.b16 %v1145
    %v1477 = vunpack.c.h.b16 %v1145
    %v1478 = vunpack.c.l.b16 %v1146
    %v1479 = vunpack.c.l.b16 %v1147
    %v1480 = vunpack.c.h.b16 %v1147
    %v1481 = vunpack.c.l.b16 %v1148
    %v1482 = vunpack.c.h.b16 %v1148
    %v1483 = vunpack.c.l.b16 %v1149
    %v1484 = vunpack.c.h.b16 %v1149
    %v1485 = vunpack.c.l.b16 %v1150
    %v1486 = vunpack.c.l.b16 %v1151
    %v1487 = vunpack.c.h.b16 %v1151
    %v1488 = vunpack.c.l.b16 %v1152
    %v1489 = vunpack.c.h.b16 %v1152
    %v1490 = vunpack.c.l.b16 %v1153
    %v1491 = vunpack.c.h.b16 %v1153
    %v1492 = vunpack.c.l.b16 %v1154
    %v1493 = vunpack.c.l.b16 %v1155
    %v1494 = vunpack.c.h.b16 %v1155
    %v1495 = vunpack.c.l.b16 %v1156
    %v1496 = vunpack.c.h.b16 %v1156
    %v1497 = vunpack.c.l.b16 %v1157
    %v1498 = vunpack.c.h.b16 %v1157
    %v1499 = vunpack.c.l.b16 %v1158
    %v1500 = vunpack.c.l.b16 %v1159
    %v1501 = vunpack.c.h.b16 %v1159
    %v1502 = vunpack.c.l.b16 %v1160
    %v1503 = vunpack.c.h.b16 %v1160
    %v1504 = vunpack.c.l.b16 %v1161
    %v1505 = vunpack.c.h.b16 %v1161
    %v1506 = vunpack.c.l.b16 %v1162
    %v1507 = vunpack.c.l.b16 %v1163
    %v1508 = vunpack.c.h.b16 %v1163
    %v1509 = vunpack.c.l.b16 %v1164
    %v1510 = vunpack.c.h.b16 %v1164
    %v1511 = vunpack.c.l.b16 %v1165
    %v1512 = vunpack.c.h.b16 %v1165
    %v1513 = vunpack.c.l.b16 %v1166
    %v1514 = vunpack.c.l.b16 %v1167
    %v1515 = vunpack.c.h.b16 %v1167
    %v1516 = vunpack.c.l.b16 %v1168
    %v1517 = vunpack.c.h.b16 %v1168
    %v1518 = vunpack.c.l.b16 %v1169
    %v1519 = vunpack.c.h.b16 %v1169
    %v1520 = vunpack.c.l.b16 %v1170
    %v1521 = vunpack.c.l.b16 %v1171
    %v1522 = vunpack.c.h.b16 %v1171
    %v1523 = vunpack.c.l.b16 %v1172
    %v1524 = vunpack.c.h.b16 %v1172
    %v1525 = vunpack.c.l.b16 %v1173
    %v1526 = vunpack.c.h.b16 %v1173
    %v1527 = vunpack.c.l.b16 %v1174
    %v1528 = vunpack.c.l.b16 %v1175
    %v1529 = vunpack.c.h.b16 %v1175
    %v1530 = vunpack.c.l.b16 %v1176
    %v1531 = vunpack.c.h.b16 %v1176
    %v1532 = vunpack.c.l.b16 %v1177
    %v1533 = vunpack.c.h.b16 %v1177
    %v1534 = vunpack.c.l.b16 %v1178
    %v1535 = vunpack.c.l.b16 %v1179
    %v1536 = vunpack.c.h.b16 %v1179
    %v1537 = vunpack.c.l.b16 %v1180
    %v1538 = vunpack.c.h.b16 %v1180
    %v1539 = vunpack.c.l.b16 %v1181
    %v1540 = vunpack.c.h.b16 %v1181
    %v1541 = vunpack.c.l.b16 %v1182
    %v1542 = vunpack.c.l.b16 %v1183
    %v1543 = vunpack.c.h.b16 %v1183
    %v1544 = vunpack.c.l.b16 %v1184
    %v1545 = vunpack.c.h.b16 %v1184
    %v1546 = vunpack.c.l.b16 %v1185
    %v1547 = vunpack.c.h.b16 %v1185
    %v1548 = vunpack.c.l.b16 %v1186
    %v1549 = vunpack.c.l.b16 %v1187
    %v1550 = vunpack.c.h.b16 %v1187
    %v1551 = vunpack.c.l.b16 %v1188
    %v1552 = vunpack.c.h.b16 %v1188
    %v1553 = vunpack.c.l.b16 %v1189
    %v1554 = vunpack.c.h.b16 %v1189
    %v1555 = vunpack.c.l.b16 %v1190
    %v1556 = vunpack.c.l.b16 %v1191
    %v1557 = vunpack.c.h.b16 %v1191
    %v1558 = vunpack.c.l.b16 %v1192
    %v1559 = vunpack.c.h.b16 %v1192
    %v1560 = vunpack.c.l.b16 %v1193
    %v1561 = vunpack.c.h.b16 %v1193
    %v1562 = vunpack.c.l.b16 %v1194
    %v1563 = vunpack.c.l.b16 %v1195
    %v1564 = vunpack.c.h.b16 %v1195
    %v1565 = vunpack.c.l.b16 %v1196
    %v1566 = vunpack.c.h.b16 %v1196
    %v1567 = vunpack.c.l.b16 %v1197
    %v1568 = vunpack.c.h.b16 %v1197
    %v1569 = vunpack.c.l.b16 %v1198
    %v1570 = vunpack.c.l.b16 %v1199
    %v1571 = vunpack.c.h.b16 %v1199
    %v1572 = vunpack.c.l.b16 %v1200
    %v1573 = vunpack.c.h.b16 %v1200
    %v1574 = vunpack.c.l.b16 %v1201
    %v1575 = vunpack.c.h.b16 %v1201
    %v1576 = vunpack.c.l.b16 %v1202
    %v1577 = vpack.c.b16 %v1360, %v1353
    %v1578 = vpack.c.b16 %v1361, %v1354
    %v1579 = vpack.c.b16 %v1362, %v1355
    %v1580 = vpack.c.b16 %v1363, %v1356
    %v1581 = vpack.c.b16 %v1364, %v1357
    %v1582 = vpack.c.b16 %v1365, %v1358
    %v1583 = vpack.c.b16 %v1366, %v1359
    %v1584 = vpack.c.b16 %v1374, %v1367
    %v1585 = vpack.c.b16 %v1375, %v1368
    %v1586 = vpack.c.b16 %v1376, %v1369
    %v1587 = vpack.c.b16 %v1377, %v1370
    %v1588 = vpack.c.b16 %v1378, %v1371
    %v1589 = vpack.c.b16 %v1379, %v1372
    %v1590 = vpack.c.b16 %v1380, %v1373
    %v1591 = vpack.c.b16 %v1388, %v1381
    %v1592 = vpack.c.b16 %v1389, %v1382
    %v1593 = vpack.c.b16 %v1390, %v1383
    %v1594 = vpack.c.b16 %v1391, %v1384
    %v1595 = vpack.c.b16 %v1392, %v1385
    %v1596 = vpack.c.b16 %v1393, %v1386
    %v1597 = vpack.c.b16 %v1394, %v1387
    %v1598 = vpack.c.b16 %v1402, %v1395
    %v1599 = vpack.c.b16 %v1403, %v1396
    %v1600 = vpack.c.b16 %v1404, %v1397
    %v1601 = vpack.c.b16 %v1405, %v1398
    %v1602 = vpack.c.b16 %v1406, %v1399
    %v1603 = vpack.c.b16 %v1407, %v1400
    %v1604 = vpack.c.b16 %v1408, %v1401
    %v1605 = vpack.c.b16 %v1416, %v1409
    %v1606 = vpack.c.b16 %v1417, %v1410
    %v1607 = vpack.c.b16 %v1418, %v1411
    %v1608 = vpack.c.b16 %v1419, %v1412
    %v1609 = vpack.c.b16 %v1420, %v1413
    %v1610 = vpack.c.b16 %v1421, %v1414
    %v1611 = vpack.c.b16 %v1422, %v1415
    %v1612 = vpack.c.b16 %v1430, %v1423
    %v1613 = vpack.c.b16 %v1431, %v1424
    %v1614 = vpack.c.b16 %v1432, %v1425
    %v1615 = vpack.c.b16 %v1433, %v1426
    %v1616 = vpack.c.b16 %v1434, %v1427
    %v1617 = vpack.c.b16 %v1435, %v1428
    %v1618 = vpack.c.b16 %v1436, %v1429
    %v1619 = vpack.c.b16 %v1444, %v1437
    %v1620 = vpack.c.b16 %v1445, %v1438
    %v1621 = vpack.c.b16 %v1446, %v1439
    %v1622 = vpack.c.b16 %v1447, %v1440
    %v1623 = vpack.c.b16 %v1448, %v1441
    %v1624 = vpack.c.b16 %v1449, %v1442
    %v1625 = vpack.c.b16 %v1450, %v1443
    %v1626 = vpack.c.b16 %v1458, %v1451
    %v1627 = vpack.c.b16 %v1459, %v1452
    %v1628 = vpack.c.b16 %v1460, %v1453
    %v1629 = vpack.c.b16 %v1461, %v1454
    %v1630 = vpack.c.b16 %v1462, %v1455
    %v1631 = vpack.c.b16 %v1463, %v1456
    %v1632 = vpack.c.b16 %v1464, %v1457
    %v1633 = vpack.c.b16 %v1472, %v1465
    %v1634 = vpack.c.b16 %v1473, %v1466
    %v1635 = vpack.c.b16 %v1474, %v1467
    %v1636 = vpack.c.b16 %v1475, %v1468
    %v1637 = vpack.c.b16 %v1476, %v1469
    %v1638 = vpack.c.b16 %v1477, %v1470
    %v1639 = vpack.c.b16 %v1478, %v1471
    %v1640 = vpack.c.b16 %v1486, %v1479
    %v1641 = vpack.c.b16 %v1487, %v1480
    %v1642 = vpack.c.b16 %v1488, %v1481
    %v1643 = vpack.c.b16 %v1489, %v1482
    %v1644 = vpack.c.b16 %v1490, %v1483
    %v1645 = vpack.c.b16 %v1491, %v1484
    %v1646 = vpack.c.b16 %v1492, %v1485
    %v1647 = vpack.c.b16 %v1500, %v1493
    %v1648 = vpack.c.b16 %v1501, %v1494
    %v1649 = vpack.c.b16 %v1502, %v1495
    %v1650 = vpack.c.b16 %v1503, %v1496
    %v1651 = vpack.c.b16 %v1504, %v1497
    %v1652 = vpack.c.b16 %v1505, %v1498
    %v1653 = vpack.c.b16 %v1506, %v1499
    %v1654 = vpack.c.b16 %v1514, %v1507
    %v1655 = vpack.c.b16 %v1515, %v1508
    %v1656 = vpack.c.b16 %v1516, %v1509
    %v1657 = vpack.c.b16 %v1517, %v1510
    %v1658 = vpack.c.b16 %v1518, %v1511
    %v1659 = vpack.c.b16 %v1519, %v1512
    %v1660 = vpack.c.b16 %v1520, %v1513
    %v1661 = vpack.c.b16 %v1528, %v1521
    %v1662 = vpack.c.b16 %v1529, %v1522
    %v1663 = vpack.c.b16 %v1530, %v1523
    %v1664 = vpack.c.b16 %v1531, %v1524
    %v1665 = vpack.c.b16 %v1532, %v1525
    %v1666 = vpack.c.b16 %v1533, %v1526
    %v1667 = vpack.c.b16 %v1534, %v1527
    %v1668 = vpack.c.b16 %v1542, %v1535
    %v1669 = vpack.c.b16 %v1543, %v1536
    %v1670 = vpack.c.b16 %v1544, %v1537
    %v1671 = vpack.c.b16 %v1545, %v1538
    %v1672 = vpack.c.b16 %v1546, %v1539
    %v1673 = vpack.c.b16 %v1547, %v1540
    %v1674 = vpack.c.b16 %v1548, %v1541
    %v1675 = vpack.c.b16 %v1556, %v1549
    %v1676 = vpack.c.b16 %v1557, %v1550
    %v1677 = vpack.c.b16 %v1558, %v1551
    %v1678 = vpack.c.b16 %v1559, %v1552
    %v1679 = vpack.c.b16 %v1560, %v1553
    %v1680 = vpack.c.b16 %v1561, %v1554
    %v1681 = vpack.c.b16 %v1562, %v1555
    %v1682 = vpack.c.b16 %v1570, %v1563
    %v1683 = vpack.c.b16 %v1571, %v1564
    %v1684 = vpack.c.b16 %v1572, %v1565
    %v1685 = vpack.c.b16 %v1573, %v1566
    %v1686 = vpack.c.b16 %v1574, %v1567
    %v1687 = vpack.c.b16 %v1575, %v1568
    %v1688 = vpack.c.b16 %v1576, %v1569
    %1801 = vmatpush.bf16.msra.mxu0 %v1626
    %1802 = vmatpush.bf16.msra.mxu0 %v1619
    %1803 = vmatpush.bf16.msra.mxu0 %v1612
    %1804 = vmatpush.bf16.msra.mxu0 %v1605
    %1805 = vmatpush.bf16.msra.mxu0 %v1598
    %1806 = vmatpush.bf16.msra.mxu0 %v1591
    %1807 = vmatpush.bf16.msra.mxu0 %v1584
    %1808 = vmatpush.bf16.msra.mxu0 %v1577
    %1809 = vmatmul.bf16.gmra.mxu0 %v1221
    %v1810 = vpop.f32.mrf.mxu0
    %v1811 = vadd.f32 %v1205, %v1810
    %v1812 = vpop.f32.mrf.mxu0
    %1813 = vdwg.mxu0
    %1814 = vmatpush.bf16.msra.mxu0 %v1682
    %1815 = vmatpush.bf16.msra.mxu0 %v1675
    %1816 = vmatpush.bf16.msra.mxu0 %v1668
    %1817 = vmatpush.bf16.msra.mxu0 %v1661
    %1818 = vmatpush.bf16.msra.mxu0 %v1654
    %1819 = vmatpush.bf16.msra.mxu0 %v1647
    %1820 = vmatpush.bf16.msra.mxu0 %v1640
    %1821 = vmatpush.bf16.msra.mxu0 %v1633
    %1822 = vmatmul.bf16.gmra.mxu0 %v1222
    %v1823 = vpop.f32.mrf.mxu0
    %v1824 = vadd.f32 %v1811, %v1823
    %v1825 = vpop.f32.mrf.mxu0
    %1826 = vdwg.mxu0
    %1827 = vmatpush.bf16.msra.mxu0 %v1627
    %1828 = vmatpush.bf16.msra.mxu0 %v1620
    %1829 = vmatpush.bf16.msra.mxu0 %v1613
    %1830 = vmatpush.bf16.msra.mxu0 %v1606
    %1831 = vmatpush.bf16.msra.mxu0 %v1599
    %1832 = vmatpush.bf16.msra.mxu0 %v1592
    %1833 = vmatpush.bf16.msra.mxu0 %v1585
    %1834 = vmatpush.bf16.msra.mxu0 %v1578
    %1835 = vmatmul.bf16.gmra.mxu0 %v1221
    %v1836 = vpop.f32.mrf.mxu0
    %v1837 = vadd.f32 %v1206, %v1836
    %v1838 = vpop.f32.mrf.mxu0
    %1839 = vdwg.mxu0
    %1840 = vmatpush.bf16.msra.mxu0 %v1683
    %1841 = vmatpush.bf16.msra.mxu0 %v1676
    %1842 = vmatpush.bf16.msra.mxu0 %v1669
    %1843 = vmatpush.bf16.msra.mxu0 %v1662
    %1844 = vmatpush.bf16.msra.mxu0 %v1655
    %1845 = vmatpush.bf16.msra.mxu0 %v1648
    %1846 = vmatpush.bf16.msra.mxu0 %v1641
    %1847 = vmatpush.bf16.msra.mxu0 %v1634
    %1848 = vmatmul.bf16.gmra.mxu0 %v1222
    %v1849 = vpop.f32.mrf.mxu0
    %v1850 = vadd.f32 %v1837, %v1849
    %v1851 = vpop.f32.mrf.mxu0
    %1852 = vdwg.mxu0
    %1853 = vmatpush.bf16.msra.mxu0 %v1628
    %1854 = vmatpush.bf16.msra.mxu0 %v1621
    %1855 = vmatpush.bf16.msra.mxu0 %v1614
    %1856 = vmatpush.bf16.msra.mxu0 %v1607
    %1857 = vmatpush.bf16.msra.mxu0 %v1600
    %1858 = vmatpush.bf16.msra.mxu0 %v1593
    %1859 = vmatpush.bf16.msra.mxu0 %v1586
    %1860 = vmatpush.bf16.msra.mxu0 %v1579
    %1861 = vmatmul.bf16.gmra.mxu0 %v1221
    %v1862 = vpop.f32.mrf.mxu0
    %v1863 = vadd.f32 %v1207, %v1862
    %v1864 = vpop.f32.mrf.mxu0
    %1865 = vdwg.mxu0
    %1866 = vmatpush.bf16.msra.mxu0 %v1684
    %1867 = vmatpush.bf16.msra.mxu0 %v1677
    %1868 = vmatpush.bf16.msra.mxu0 %v1670
    %1869 = vmatpush.bf16.msra.mxu0 %v1663
    %1870 = vmatpush.bf16.msra.mxu0 %v1656
    %1871 = vmatpush.bf16.msra.mxu0 %v1649
    %1872 = vmatpush.bf16.msra.mxu0 %v1642
    %1873 = vmatpush.bf16.msra.mxu0 %v1635
    %1874 = vmatmul.bf16.gmra.mxu0 %v1222
    %v1875 = vpop.f32.mrf.mxu0
    %v1876 = vadd.f32 %v1863, %v1875
    %v1877 = vpop.f32.mrf.mxu0
    %1878 = vdwg.mxu0
    %1879 = vmatpush.bf16.msra.mxu0 %v1629
    %1880 = vmatpush.bf16.msra.mxu0 %v1622
    %1881 = vmatpush.bf16.msra.mxu0 %v1615
    %1882 = vmatpush.bf16.msra.mxu0 %v1608
    %1883 = vmatpush.bf16.msra.mxu0 %v1601
    %1884 = vmatpush.bf16.msra.mxu0 %v1594
    %1885 = vmatpush.bf16.msra.mxu0 %v1587
    %1886 = vmatpush.bf16.msra.mxu0 %v1580
    %1887 = vmatmul.bf16.gmra.mxu0 %v1221
    %v1888 = vpop.f32.mrf.mxu0
    %v1889 = vadd.f32 %v1208, %v1888
    %v1890 = vpop.f32.mrf.mxu0
    %1891 = vdwg.mxu0
    %1892 = vmatpush.bf16.msra.mxu0 %v1685
    %1893 = vmatpush.bf16.msra.mxu0 %v1678
    %1894 = vmatpush.bf16.msra.mxu0 %v1671
    %1895 = vmatpush.bf16.msra.mxu0 %v1664
    %1896 = vmatpush.bf16.msra.mxu0 %v1657
    %1897 = vmatpush.bf16.msra.mxu0 %v1650
    %1898 = vmatpush.bf16.msra.mxu0 %v1643
    %1899 = vmatpush.bf16.msra.mxu0 %v1636
    %1900 = vmatmul.bf16.gmra.mxu0 %v1222
    %v1901 = vpop.f32.mrf.mxu0
    %v1902 = vadd.f32 %v1889, %v1901
    %v1903 = vpop.f32.mrf.mxu0
    %1904 = vdwg.mxu0
    %1905 = vmatpush.bf16.msra.mxu0 %v1630
    %1906 = vmatpush.bf16.msra.mxu0 %v1623
    %1907 = vmatpush.bf16.msra.mxu0 %v1616
    %1908 = vmatpush.bf16.msra.mxu0 %v1609
    %1909 = vmatpush.bf16.msra.mxu0 %v1602
    %1910 = vmatpush.bf16.msra.mxu0 %v1595
    %1911 = vmatpush.bf16.msra.mxu0 %v1588
    %1912 = vmatpush.bf16.msra.mxu0 %v1581
    %1913 = vmatmul.bf16.gmra.mxu0 %v1221
    %v1914 = vpop.f32.mrf.mxu0
    %v1915 = vadd.f32 %v1209, %v1914
    %v1916 = vpop.f32.mrf.mxu0
    %1917 = vdwg.mxu0
    %1918 = vmatpush.bf16.msra.mxu0 %v1686
    %1919 = vmatpush.bf16.msra.mxu0 %v1679
    %1920 = vmatpush.bf16.msra.mxu0 %v1672
    %1921 = vmatpush.bf16.msra.mxu0 %v1665
    %1922 = vmatpush.bf16.msra.mxu0 %v1658
    %1923 = vmatpush.bf16.msra.mxu0 %v1651
    %1924 = vmatpush.bf16.msra.mxu0 %v1644
    %1925 = vmatpush.bf16.msra.mxu0 %v1637
    %1926 = vmatmul.bf16.gmra.mxu0 %v1222
    %v1927 = vpop.f32.mrf.mxu0
    %v1928 = vadd.f32 %v1915, %v1927
    %v1929 = vpop.f32.mrf.mxu0
    %1930 = vdwg.mxu0
    %1931 = vmatpush.bf16.msra.mxu0 %v1631
    %1932 = vmatpush.bf16.msra.mxu0 %v1624
    %1933 = vmatpush.bf16.msra.mxu0 %v1617
    %1934 = vmatpush.bf16.msra.mxu0 %v1610
    %1935 = vmatpush.bf16.msra.mxu0 %v1603
    %1936 = vmatpush.bf16.msra.mxu0 %v1596
    %1937 = vmatpush.bf16.msra.mxu0 %v1589
    %1938 = vmatpush.bf16.msra.mxu0 %v1582
    %1939 = vmatmul.bf16.gmra.mxu0 %v1221
    %v1940 = vpop.f32.mrf.mxu0
    %v1941 = vadd.f32 %v1210, %v1940
    %v1942 = vpop.f32.mrf.mxu0
    %1943 = vdwg.mxu0
    %1944 = vmatpush.bf16.msra.mxu0 %v1687
    %1945 = vmatpush.bf16.msra.mxu0 %v1680
    %1946 = vmatpush.bf16.msra.mxu0 %v1673
    %1947 = vmatpush.bf16.msra.mxu0 %v1666
    %1948 = vmatpush.bf16.msra.mxu0 %v1659
    %1949 = vmatpush.bf16.msra.mxu0 %v1652
    %1950 = vmatpush.bf16.msra.mxu0 %v1645
    %1951 = vmatpush.bf16.msra.mxu0 %v1638
    %1952 = vmatmul.bf16.gmra.mxu0 %v1222
    %v1953 = vpop.f32.mrf.mxu0
    %v1954 = vadd.f32 %v1941, %v1953
    %v1955 = vpop.f32.mrf.mxu0
    %1956 = vdwg.mxu0
    %1957 = vmatpush.bf16.msra.mxu0 %v1632
    %1958 = vmatpush.bf16.msra.mxu0 %v1625
    %1959 = vmatpush.bf16.msra.mxu0 %v1618
    %1960 = vmatpush.bf16.msra.mxu0 %v1611
    %1961 = vmatpush.bf16.msra.mxu0 %v1604
    %1962 = vmatpush.bf16.msra.mxu0 %v1597
    %1963 = vmatpush.bf16.msra.mxu0 %v1590
    %1964 = vmatpush.bf16.msra.mxu0 %v1583
    %1965 = vmatmul.bf16.gmra.mxu0 %v1221
    %v1966 = vpop.f32.mrf.mxu0
    %v1967 = vadd.f32 %v1211, %v1966
    %v1968 = vpop.f32.mrf.mxu0
    %1969 = vdwg.mxu0
    %1970 = vmatpush.bf16.msra.mxu0 %v1688
    %1971 = vmatpush.bf16.msra.mxu0 %v1681
    %1972 = vmatpush.bf16.msra.mxu0 %v1674
    %1973 = vmatpush.bf16.msra.mxu0 %v1667
    %1974 = vmatpush.bf16.msra.mxu0 %v1660
    %1975 = vmatpush.bf16.msra.mxu0 %v1653
    %1976 = vmatpush.bf16.msra.mxu0 %v1646
    %1977 = vmatpush.bf16.msra.mxu0 %v1639
    %1978 = vmatmul.bf16.gmra.mxu0 %v1222
    %v1979 = vpop.f32.mrf.mxu0
    %v1980 = vadd.f32 %v1967, %v1979
    %v1981 = vpop.f32.mrf.mxu0
    %1982 = vdwg.mxu0
    %v1983 = vsub.f32 0.0, %v1824
    %v1984 = vsub.f32 0.0, %v1850
    %v1985 = vsub.f32 0.0, %v1876
    %v1986 = vsub.f32 0.0, %v1902
    %v1987 = vsub.f32 0.0, %v1928
    %v1988 = vsub.f32 0.0, %v1954
    %v1989 = vsub.f32 0.0, %v1980
    %v1990 = vmul.f32 %v1983, 1.442695
    %v1991 = vpow.pop %v1990
    %v1992 = vmul.f32 %v1984, 1.442695
    %v1993 = vpow.pop %v1992
    %v1994 = vmul.f32 %v1985, 1.442695
    %v1995 = vpow.pop %v1994
    %v1996 = vmul.f32 %v1986, 1.442695
    %v1997 = vpow.pop %v1996
    %v1998 = vmul.f32 %v1987, 1.442695
    %v1999 = vpow.pop %v1998
    %v2000 = vmul.f32 %v1988, 1.442695
    %v2001 = vpow.pop %v2000
    %v2002 = vmul.f32 %v1989, 1.442695
    %v2003 = vpow.pop %v2002
    %v2004 = vadd.f32 %v1991, 1.0
    %v2005 = vadd.f32 %v1993, 1.0
    %v2006 = vadd.f32 %v1995, 1.0
    %v2007 = vadd.f32 %v1997, 1.0
    %v2008 = vadd.f32 %v1999, 1.0
    %v2009 = vadd.f32 %v2001, 1.0
    %v2010 = vadd.f32 %v2003, 1.0
    %v2011 = vrcp.pop %v2004
    %v2012 = vrcp.pop %v2005
    %v2013 = vrcp.pop %v2006
    %v2014 = vrcp.pop %v2007
    %v2015 = vrcp.pop %v2008
    %v2016 = vrcp.pop %v2009
    %v2017 = vrcp.pop %v2010
    %v2025 = vrot.slane %v2012, 6
    %v2026 = vrot.slane %v2013, 4
    %v2027 = vrot.slane %v2014, 2
    %v2028 = vrot.slane %v2016, 6
    %v2029 = vrot.slane %v2017, 4
    %vm2030 = vcmask 1041408
    %v2031 = vsel %vm2030, %v2011, %v2025
    %vm2032 = vcmask 1045508
    %v2033 = vsel %vm2032, %v2026, %v2027
    %vm2034 = vcmask 1043456
    %v2035 = vsel %vm2034, %v2031, %v2033
    %v2036 = vsel %vm2030, %v2015, %v2028
    %v2037 = vsel %vm2034, %v2036, %v2029
    %2040 = vst [vmem:[%s12] sm:$0xff] %v2035
    %vm2041 = vcmask 1043458
    %vm2042 = vmor %vm2041, %vm2030
    %vm2043 = vcmask 128004
    %vm2044 = vmor %vm2043, %vm2042
    %2045 = vst.msk [vmem:[%s12 + $0x8] sm:$0x3f] %vm2044, %v2037
    // Predicated region
    $region38: #{ae_forward.1} parent=1 // pred_check
      _
    $region39: #{ae_forward.1} parent=1 // pred_check_branch
      %2047 = sbr.rel (0) target = $region41
    $region40: #{ae_forward.1} parent=1 // pred_region
      %2049 = vsyncadd [#allocation3], 0
      %s2051 = sshll.u32 [#allocation2], 4
      %s2052 = int_to_ptr.vmem [resolvable:$true] %s2051
      %s2053 = sshll.u32 %s9, 4
      %s2054 = int_to_ptr.hbm [resolvable:$true] %s2053
      %2056 = dma.vmem_to_hbm [thread:$0]  %s2052, 32, %s2054, [#allocation3]
    $region41: #{ae_forward.1} parent=1 // pred_fallthru
      _
    // Predicated region
    $region42: #{ae_forward.1} parent=1 // pred_check
      _
    $region43: #{ae_forward.1} parent=1 // pred_check_branch
      %2058 = sbr.rel (0) target = $region45
    $region44: #{ae_forward.1} parent=1 // pred_region
      _
    $region45: #{ae_forward.1} parent=1 // pred_fallthru
      _
    // Predicated region
    $region46: #{ae_forward.1} parent=1 // pred_check
      _
    $region47: #{ae_forward.1} parent=1 // pred_check_branch
      %2060 = sbr.rel (0) target = $region49
    $region48: #{ae_forward.1} parent=1 // pred_region
      %2062 = vsyncadd [#allocation5], 0
      %s2064 = sshll.u32 [#allocation4], 4
      %s2065 = int_to_ptr.vmem [resolvable:$true] %s2064
      %s2066 = sshll.u32 %s11, 4
      %s2067 = int_to_ptr.hbm [resolvable:$true] %s2066
      %2069 = dma.vmem_to_hbm [thread:$0]  %s2065, 32, %s2067, [#allocation5]
    $region49: #{ae_forward.1} parent=1 // pred_fallthru
      _
    // Predicated region
    $region50: #{ae_forward.1} parent=1 // pred_check
      _
    $region51: #{ae_forward.1} parent=1 // pred_check_branch
      %2071 = sbr.rel (0) target = $region53
    $region52: #{ae_forward.1} parent=1 // pred_region
      _
    $region53: #{ae_forward.1} parent=1 // pred_fallthru
      _
    // Predicated region
    $region54: #{ae_forward.1} parent=1 // pred_check
      _
    $region55: #{ae_forward.1} parent=1 // pred_check_branch
      %2073 = sbr.rel (0) target = $region57
    $region56: #{ae_forward.1} parent=1 // pred_region
      %2075 = dma.done [#allocation3], 32
    $region57: #{ae_forward.1} parent=1 // pred_fallthru
      _
    // Predicated region
    $region58: #{ae_forward.1} parent=1 // pred_check
      _
    $region59: #{ae_forward.1} parent=1 // pred_check_branch
      %2077 = sbr.rel (0) target = $region61
    $region60: #{ae_forward.1} parent=1 // pred_region
      _
    $region61: #{ae_forward.1} parent=1 // pred_fallthru
      _
    // Predicated region
    $region62: #{ae_forward.1} parent=1 // pred_check
      _
    $region63: #{ae_forward.1} parent=1 // pred_check_branch
      %2079 = sbr.rel (0) target = $region65
    $region64: #{ae_forward.1} parent=1 // pred_region
      %2081 = dma.done [#allocation5], 32
    $region65: #{ae_forward.1} parent=1 // pred_fallthru
      _
    // Predicated region
    $region66: #{ae_forward.1} parent=1 // pred_check
      _
    $region67: #{ae_forward.1} parent=1 // pred_check_branch
      %2083 = sbr.rel (0) target = $region69
    $region68: #{ae_forward.1} parent=1 // pred_region
      _
    $region69: #{ae_forward.1} parent=1 // pred_fallthru
      _
    %2084 = vsyncpa [#allocation3], 1
    %2085 = vsyncpa [#allocation5], 1

</llo_original>
